<compile_context>
chip_gen: v5e
topology: v5e:2x2
jax: 0.10.0
libtpu: 0.0.40
codegen_flags: <defaults>
</compile_context>

<pallas_src>
import functools

import jax
import jax.numpy as jnp
from jax import lax
from jax.experimental import pallas as pl
from jax.experimental.pallas import tpu as pltpu


def _pfrb_kernel(x_ref, m_ref, wp_ref, bp_ref, wd_ref, bd_ref, wa_ref, ba_ref,
                 out_ref, patch_buf, *, W):
    """Per-batch-element body.

    x_ref   : (T*C, HW)            input frame stack (frame-major channels)
    m_ref   : (9, 1, HW)           0/1 border masks per conv tap (tap-major)
    wp_ref  : (T*C, 9*T*C)         proj_3 weights (im2col, frame-block-diag)
    bp_ref  : (T*C, 1)
    wd_ref  : (C, T*C)             dist_1 weights
    bd_ref  : (C, 1)
    wa_ref  : (T*C, 9*T*C + 9*C)   agg_3 weights ([y-part | dist-part])
    ba_ref  : (T*C, 1)
    out_ref : (T*C, HW)
    patch_buf : VMEM (9*T*C + 9*C, HW) shared im2col patch buffer
    """
    TC, HW = out_ref.shape
    C = bd_ref.shape[0]
    NT = 9

    taps = [(oy, ox) for oy in (-1, 0, 1) for ox in (-1, 0, 1)]
    # Hoist the (1, HW) masks into registers once.
    ms = [m_ref[k] for k in range(NT)]

    def write_patch(plane, nrows, base):
        # plane: (nrows, HW).  im2col of a SAME 3x3 conv: for tap k, row block
        # [base + k*nrows, base + (k+1)*nrows) holds the lane-rolled plane with
        # out-of-bounds source pixels zeroed by the border mask.
        for k, (oy, ox) in enumerate(taps):
            s = oy * W + ox                    # flat source offset of this tap
            if s == 0:
                val = plane                    # center tap: no roll, no mask
            else:
                val = pltpu.roll(plane, (-s) % HW, axis=1) * ms[k]
            patch_buf[base + k * nrows:base + (k + 1) * nrows, :] = val

    x_all = x_ref[...].astype(jnp.float32)     # (TC, HW)

    # --- proj_3: grouped 3x3 over all frames as one block-diagonal matmul ---
    write_patch(x_all, TC, 0)
    y_all = jnp.dot(wp_ref[...], patch_buf[0:NT * TC, :],
                    preferred_element_type=jnp.float32) + bp_ref[...]

    # --- dist_1: 1x1 conv over the T*C proj features -> C shared features ---
    d = jnp.dot(wd_ref[...], y_all,
                preferred_element_type=jnp.float32) + bd_ref[...]

    # --- agg_3: grouped 3x3 on [y_t, dist]; y-part and dist-part fused into a
    #     single matmul against the combined patch buffer ---
    write_patch(y_all, TC, 0)                  # overwrite the x-patch rows
    write_patch(d, C, NT * TC)                 # shared dist patch rows
    z = jnp.dot(wa_ref[...], patch_buf[...],
                preferred_element_type=jnp.float32) + ba_ref[...]

    out_ref[...] = (x_all + z).astype(out_ref.dtype)


def _grouped3x3_to_blockdiag(w, T):
    """(T*Co, Ci, 3, 3) grouped-by-frame conv weight -> (T*Co, 9*T*Ci) im2col
    matrix (tap-major, frame-block-diagonal): col = k*(T*Ci) + t*Ci + ci."""
    TCo, Ci = w.shape[0], w.shape[1]
    Co = TCo // T
    wt = jnp.transpose(w.reshape(T, Co, Ci, 3, 3), (0, 1, 3, 4, 2))
    wt = wt.reshape(T, Co, 9, Ci)                              # [t, o, k, c]
    eye = jnp.eye(T, dtype=w.dtype)
    bd = wt[:, :, :, None, :] * eye[:, None, None, :, None]    # [t, o, k, s, c]
    return bd.reshape(T * Co, 9 * T * Ci)


def _dense3x3_to_im2col(w):
    """(Co, Ci, 3, 3) -> (Co, 9*Ci), tap-major: col = k*Ci + ci."""
    Co, Ci = w.shape[0], w.shape[1]
    return jnp.transpose(w, (0, 2, 3, 1)).reshape(Co, 9 * Ci)


def pfrb_forward(xs, w_proj, b_proj, w_dist, b_dist, w_agg, b_agg):
    """xs: (B, C, T, H, W) float32 -> (B, C, T, H, W).  PyTorch-layout params."""
    B, C, T, H, W = xs.shape
    TC, HW = T * C, H * W

    # (B, C, T, H, W) -> (B, T*C, H*W): frame-major channel stack on sublanes,
    # flattened pixels on lanes.
    x = jnp.transpose(xs, (0, 2, 1, 3, 4)).reshape(B, TC, HW)

    # Precompute the 9 border masks (tap-major, same order as in the kernel).
    rows = jnp.arange(H)[:, None]
    cols = jnp.arange(W)[None, :]
    mlist = []
    for oy in (-1, 0, 1):
        for ox in (-1, 0, 1):
            ok = ((rows + oy >= 0) & (rows + oy < H) &
                  (cols + ox >= 0) & (cols + ox < W))
            mlist.append(ok.reshape(1, HW))
    masks = jnp.stack(mlist, axis=0).astype(jnp.float32)        # (9, 1, HW)

    # Host-side weight repacking into the fused im2col layouts.
    wp_k = _grouped3x3_to_blockdiag(w_proj, T)                  # (TC, 9*TC)
    bp_k = b_proj.reshape(TC, 1)
    wd_k = w_dist[:, :, 0, 0]                                   # (C, TC)
    bd_k = b_dist.reshape(C, 1)
    wa = w_agg.reshape(T, C, 2 * C, 3, 3)
    way = _grouped3x3_to_blockdiag(wa[:, :, :C].reshape(TC, C, 3, 3), T)
    wad = _dense3x3_to_im2col(wa[:, :, C:].reshape(TC, C, 3, 3))
    wa_k = jnp.concatenate([way, wad], axis=1)                  # (TC, 9TC+9C)
    ba_k = b_agg.reshape(TC, 1)

    def full_spec(a):
        nd = a.ndim
        return pl.BlockSpec(a.shape, lambda b, _nd=nd: (0,) * _nd)

    kernel = functools.partial(_pfrb_kernel, W=W)

    out = pl.pallas_call(
        kernel,
        out_shape=jax.ShapeDtypeStruct((B, TC, HW), xs.dtype),
        grid_spec=pltpu.PrefetchScalarGridSpec(
            num_scalar_prefetch=0,
            grid=(B,),
            in_specs=[
                pl.BlockSpec((pl.Squeezed(), TC, HW), lambda b: (b, 0, 0)),
                full_spec(masks),
                full_spec(wp_k), full_spec(bp_k),
                full_spec(wd_k), full_spec(bd_k),
                full_spec(wa_k), full_spec(ba_k),
            ],
            out_specs=pl.BlockSpec((pl.Squeezed(), TC, HW),
                                   lambda b: (b, 0, 0)),
            scratch_shapes=[
                pltpu.VMEM((9 * TC + 9 * C, HW), jnp.float32),
            ],
        ),
        compiler_params=pltpu.CompilerParams(
            dimension_semantics=("parallel",),
            vmem_limit_bytes=32 * 1024 * 1024,
        ),
    )(x, masks, wp_k, bp_k, wd_k, bd_k, wa_k, ba_k)

    # (B, T*C, H*W) -> (B, C, T, H, W)
    return jnp.transpose(out.reshape(B, T, C, H, W), (0, 2, 1, 3, 4))


def reference_forward(xs, w_proj, b_proj, w_dist, b_dist, w_agg, b_agg, T):
    """Plain-JAX replica of the PyTorch forward (parameter_sharing=False)."""
    B, C, _, H, W = xs.shape
    hp = lax.Precision.HIGHEST
    x2 = jnp.transpose(xs, (0, 2, 1, 3, 4)).reshape(B, T * C, H, W)
    feat = lax.conv_general_dilated(x2, w_proj, (1, 1), 'SAME',
                                    feature_group_count=T, precision=hp)
    feat = feat + b_proj[None, :, None, None]
    feat_dist = lax.conv_general_dilated(feat, w_dist, (1, 1), 'SAME',
                                         precision=hp)
    feat_dist = feat_dist + b_dist[None, :, None, None]           # (B, C, H, W)
    feat_r = feat.reshape(B, T, C, H, W)
    fd = jnp.broadcast_to(feat_dist[:, None], (B, T, C, H, W))
    cat = jnp.concatenate([feat_r, fd], axis=2).reshape(B, T * 2 * C, H, W)
    agg = lax.conv_general_dilated(cat, w_agg, (1, 1), 'SAME',
                                   feature_group_count=T, precision=hp)
    agg = agg + b_agg[None, :, None, None]
    agg = agg.reshape(B, T, C, H, W).transpose(0, 2, 1, 3, 4)
    return xs + agg


# TODO(synk): parameter_sharing=True branch (Conv3d with 1x3x3 kernels) not
# implemented; only the default (parameter_sharing=False) forward is covered.

if __name__ == "__main__":
    B, c_base, n_frames, H, W = 2, 4, 3, 16, 16
    C, T = c_base, n_frames

    key = jax.random.PRNGKey(0)
    kx, k1, k2, k3, k4, k5, k6 = jax.random.split(key, 7)

    xs = jax.random.normal(kx, (B, C, T, H, W), jnp.float32)

    # PyTorch-shaped parameters (deterministic synthetic init).
    w_proj = 0.1 * jax.random.normal(k1, (T * C, C, 3, 3), jnp.float32)
    b_proj = 0.1 * jax.random.normal(k2, (T * C,), jnp.float32)
    w_dist = 0.1 * jax.random.normal(k3, (C, T * C, 1, 1), jnp.float32)
    b_dist = 0.1 * jax.random.normal(k4, (C,), jnp.float32)
    w_agg = 0.1 * jax.random.normal(k5, (T * C, 2 * C, 3, 3), jnp.float32)
    b_agg = 0.1 * jax.random.normal(k6, (T * C,), jnp.float32)

    pfrb = jax.jit(pfrb_forward)
    out = pfrb(xs, w_proj, b_proj, w_dist, b_dist, w_agg, b_agg)
    out = jax.block_until_ready(out)

    ref = reference_forward(xs, w_proj, b_proj, w_dist, b_dist, w_agg, b_agg, T)
    ref = jax.block_until_ready(ref)

    assert out.shape == (B, C, T, H, W)
    # Tolerance accounts for MXU default-precision accumulation differences
    # between the Pallas matmuls and XLA's conv lowering (values are O(1)).
    assert jnp.allclose(out, ref, atol=5e-3, rtol=5e-3), (
        f"max abs err = {jnp.max(jnp.abs(out - ref))}")
    print("KERNEL_OK")
</pallas_src>

<mosaic_0001>
module attributes {stable_mosaic.version = 11 : i64} {
  func.func @_pfrb_kernel(%arg0: i32, %arg1: memref<1x12x256xf32, #tpu.memory_space<vmem>>, %arg2: memref<9x1x256xf32, #tpu.memory_space<vmem>>, %arg3: memref<12x108xf32, #tpu.memory_space<vmem>>, %arg4: memref<12x1xf32, #tpu.memory_space<vmem>>, %arg5: memref<4x12xf32, #tpu.memory_space<vmem>>, %arg6: memref<4x1xf32, #tpu.memory_space<vmem>>, %arg7: memref<12x144xf32, #tpu.memory_space<vmem>>, %arg8: memref<12x1xf32, #tpu.memory_space<vmem>>, %arg9: memref<1x12x256xf32, #tpu.memory_space<vmem>>, %arg10: memref<144x256xf32, #tpu.memory_space<vmem>>) attributes {dimension_semantics = [#tpu.dimension_semantics<parallel>], iteration_bounds = array<i64: 2>, scalar_prefetch = 0 : i64, scratch_operands = 1 : i64, tpu.core_type = #tpu.core_type<tc>, window_params = [{transform_indices = @transform_0, window_bounds = array<i64: 1, 12, 256>}, {pipeline_mode = #tpu.pipeline_mode<synchronous>, transform_indices = @transform_1, window_bounds = array<i64: 9, 1, 256>}, {pipeline_mode = #tpu.pipeline_mode<synchronous>, transform_indices = @transform_2, window_bounds = array<i64: 12, 108>}, {pipeline_mode = #tpu.pipeline_mode<synchronous>, transform_indices = @transform_3, window_bounds = array<i64: 12, 1>}, {pipeline_mode = #tpu.pipeline_mode<synchronous>, transform_indices = @transform_4, window_bounds = array<i64: 4, 12>}, {pipeline_mode = #tpu.pipeline_mode<synchronous>, transform_indices = @transform_5, window_bounds = array<i64: 4, 1>}, {pipeline_mode = #tpu.pipeline_mode<synchronous>, transform_indices = @transform_6, window_bounds = array<i64: 12, 144>}, {pipeline_mode = #tpu.pipeline_mode<synchronous>, transform_indices = @transform_7, window_bounds = array<i64: 12, 1>}, {transform_indices = @transform_8, window_bounds = array<i64: 1, 12, 256>}]} {
    %c0 = arith.constant 0 : index
    %c0_0 = arith.constant 0 : index
    %c0_1 = arith.constant 0 : index
    %0 = vector.load %arg2[%c0, %c0_0, %c0_1] : memref<9x1x256xf32, #tpu.memory_space<vmem>>, vector<1x1x256xf32>
    %1 = vector.shape_cast %0 : vector<1x1x256xf32> to vector<1x256xf32>
    %c1 = arith.constant 1 : index
    %c0_2 = arith.constant 0 : index
    %c0_3 = arith.constant 0 : index
    %2 = vector.load %arg2[%c1, %c0_2, %c0_3] : memref<9x1x256xf32, #tpu.memory_space<vmem>>, vector<1x1x256xf32>
    %3 = vector.shape_cast %2 : vector<1x1x256xf32> to vector<1x256xf32>
    %c2 = arith.constant 2 : index
    %c0_4 = arith.constant 0 : index
    %c0_5 = arith.constant 0 : index
    %4 = vector.load %arg2[%c2, %c0_4, %c0_5] : memref<9x1x256xf32, #tpu.memory_space<vmem>>, vector<1x1x256xf32>
    %5 = vector.shape_cast %4 : vector<1x1x256xf32> to vector<1x256xf32>
    %c3 = arith.constant 3 : index
    %c0_6 = arith.constant 0 : index
    %c0_7 = arith.constant 0 : index
    %6 = vector.load %arg2[%c3, %c0_6, %c0_7] : memref<9x1x256xf32, #tpu.memory_space<vmem>>, vector<1x1x256xf32>
    %7 = vector.shape_cast %6 : vector<1x1x256xf32> to vector<1x256xf32>
    %c5 = arith.constant 5 : index
    %c0_8 = arith.constant 0 : index
    %c0_9 = arith.constant 0 : index
    %8 = vector.load %arg2[%c5, %c0_8, %c0_9] : memref<9x1x256xf32, #tpu.memory_space<vmem>>, vector<1x1x256xf32>
    %9 = vector.shape_cast %8 : vector<1x1x256xf32> to vector<1x256xf32>
    %c6 = arith.constant 6 : index
    %c0_10 = arith.constant 0 : index
    %c0_11 = arith.constant 0 : index
    %10 = vector.load %arg2[%c6, %c0_10, %c0_11] : memref<9x1x256xf32, #tpu.memory_space<vmem>>, vector<1x1x256xf32>
    %11 = vector.shape_cast %10 : vector<1x1x256xf32> to vector<1x256xf32>
    %c7 = arith.constant 7 : index
    %c0_12 = arith.constant 0 : index
    %c0_13 = arith.constant 0 : index
    %12 = vector.load %arg2[%c7, %c0_12, %c0_13] : memref<9x1x256xf32, #tpu.memory_space<vmem>>, vector<1x1x256xf32>
    %13 = vector.shape_cast %12 : vector<1x1x256xf32> to vector<1x256xf32>
    %c8 = arith.constant 8 : index
    %c0_14 = arith.constant 0 : index
    %c0_15 = arith.constant 0 : index
    %14 = vector.load %arg2[%c8, %c0_14, %c0_15] : memref<9x1x256xf32, #tpu.memory_space<vmem>>, vector<1x1x256xf32>
    %15 = vector.shape_cast %14 : vector<1x1x256xf32> to vector<1x256xf32>
    %c0_16 = arith.constant 0 : index
    %c0_17 = arith.constant 0 : index
    %c0_18 = arith.constant 0 : index
    %16 = vector.load %arg1[%c0_16, %c0_17, %c0_18] : memref<1x12x256xf32, #tpu.memory_space<vmem>>, vector<1x12x256xf32>
    %17 = vector.shape_cast %16 : vector<1x12x256xf32> to vector<12x256xf32>
    %c17_i32 = arith.constant 17 : i32
    %18 = tpu.dynamic_rotate %17 by %c17_i32 dim 1 : vector<12x256xf32>, i32 -> vector<12x256xf32>
    %19 = vector.broadcast %1 : vector<1x256xf32> to vector<12x256xf32>
    %20 = arith.mulf %18, %19 : vector<12x256xf32>
    %c0_19 = arith.constant 0 : index
    %c0_20 = arith.constant 0 : index
    %21 = vector.load %arg10[%c0_19, %c0_20] : memref<144x256xf32, #tpu.memory_space<vmem>>, vector<12x256xf32>
    tpu.vector_store %arg10[%c0_19, %c0_20], %20 {strides = array<i32>} : memref<144x256xf32, #tpu.memory_space<vmem>>, vector<12x256xf32>,
    %c16_i32 = arith.constant 16 : i32
    %22 = tpu.dynamic_rotate %17 by %c16_i32 dim 1 : vector<12x256xf32>, i32 -> vector<12x256xf32>
    %23 = vector.broadcast %3 : vector<1x256xf32> to vector<12x256xf32>
    %24 = arith.mulf %22, %23 : vector<12x256xf32>
    %c12 = arith.constant 12 : index
    %c0_21 = arith.constant 0 : index
    %25 = vector.load %arg10[%c12, %c0_21] : memref<144x256xf32, #tpu.memory_space<vmem>>, vector<12x256xf32>
    tpu.vector_store %arg10[%c12, %c0_21], %24 {strides = array<i32>} : memref<144x256xf32, #tpu.memory_space<vmem>>, vector<12x256xf32>,
    %c15_i32 = arith.constant 15 : i32
    %26 = tpu.dynamic_rotate %17 by %c15_i32 dim 1 : vector<12x256xf32>, i32 -> vector<12x256xf32>
    %27 = vector.broadcast %5 : vector<1x256xf32> to vector<12x256xf32>
    %28 = arith.mulf %26, %27 : vector<12x256xf32>
    %c24 = arith.constant 24 : index
    %c0_22 = arith.constant 0 : index
    %29 = vector.load %arg10[%c24, %c0_22] : memref<144x256xf32, #tpu.memory_space<vmem>>, vector<12x256xf32>
    tpu.vector_store %arg10[%c24, %c0_22], %28 {strides = array<i32>} : memref<144x256xf32, #tpu.memory_space<vmem>>, vector<12x256xf32>,
    %c1_i32 = arith.constant 1 : i32
    %30 = tpu.dynamic_rotate %17 by %c1_i32 dim 1 : vector<12x256xf32>, i32 -> vector<12x256xf32>
    %31 = vector.broadcast %7 : vector<1x256xf32> to vector<12x256xf32>
    %32 = arith.mulf %30, %31 : vector<12x256xf32>
    %c36 = arith.constant 36 : index
    %c0_23 = arith.constant 0 : index
    %33 = vector.load %arg10[%c36, %c0_23] : memref<144x256xf32, #tpu.memory_space<vmem>>, vector<12x256xf32>
    tpu.vector_store %arg10[%c36, %c0_23], %32 {strides = array<i32>} : memref<144x256xf32, #tpu.memory_space<vmem>>, vector<12x256xf32>,
    %c48 = arith.constant 48 : index
    %c0_24 = arith.constant 0 : index
    %34 = vector.load %arg10[%c48, %c0_24] : memref<144x256xf32, #tpu.memory_space<vmem>>, vector<12x256xf32>
    tpu.vector_store %arg10[%c48, %c0_24], %17 {strides = array<i32>} : memref<144x256xf32, #tpu.memory_space<vmem>>, vector<12x256xf32>,
    %c255_i32 = arith.constant 255 : i32
    %35 = tpu.dynamic_rotate %17 by %c255_i32 dim 1 : vector<12x256xf32>, i32 -> vector<12x256xf32>
    %36 = vector.broadcast %9 : vector<1x256xf32> to vector<12x256xf32>
    %37 = arith.mulf %35, %36 : vector<12x256xf32>
    %c60 = arith.constant 60 : index
    %c0_25 = arith.constant 0 : index
    %38 = vector.load %arg10[%c60, %c0_25] : memref<144x256xf32, #tpu.memory_space<vmem>>, vector<12x256xf32>
    tpu.vector_store %arg10[%c60, %c0_25], %37 {strides = array<i32>} : memref<144x256xf32, #tpu.memory_space<vmem>>, vector<12x256xf32>,
    %c241_i32 = arith.constant 241 : i32
    %39 = tpu.dynamic_rotate %17 by %c241_i32 dim 1 : vector<12x256xf32>, i32 -> vector<12x256xf32>
    %40 = vector.broadcast %11 : vector<1x256xf32> to vector<12x256xf32>
    %41 = arith.mulf %39, %40 : vector<12x256xf32>
    %c72 = arith.constant 72 : index
    %c0_26 = arith.constant 0 : index
    %42 = vector.load %arg10[%c72, %c0_26] : memref<144x256xf32, #tpu.memory_space<vmem>>, vector<12x256xf32>
    tpu.vector_store %arg10[%c72, %c0_26], %41 {strides = array<i32>} : memref<144x256xf32, #tpu.memory_space<vmem>>, vector<12x256xf32>,
    %c240_i32 = arith.constant 240 : i32
    %43 = tpu.dynamic_rotate %17 by %c240_i32 dim 1 : vector<12x256xf32>, i32 -> vector<12x256xf32>
    %44 = vector.broadcast %13 : vector<1x256xf32> to vector<12x256xf32>
    %45 = arith.mulf %43, %44 : vector<12x256xf32>
    %c84 = arith.constant 84 : index
    %c0_27 = arith.constant 0 : index
    %46 = vector.load %arg10[%c84, %c0_27] : memref<144x256xf32, #tpu.memory_space<vmem>>, vector<12x256xf32>
    tpu.vector_store %arg10[%c84, %c0_27], %45 {strides = array<i32>} : memref<144x256xf32, #tpu.memory_space<vmem>>, vector<12x256xf32>,
    %c239_i32 = arith.constant 239 : i32
    %47 = tpu.dynamic_rotate %17 by %c239_i32 dim 1 : vector<12x256xf32>, i32 -> vector<12x256xf32>
    %48 = vector.broadcast %15 : vector<1x256xf32> to vector<12x256xf32>
    %49 = arith.mulf %47, %48 : vector<12x256xf32>
    %c96 = arith.constant 96 : index
    %c0_28 = arith.constant 0 : index
    %50 = vector.load %arg10[%c96, %c0_28] : memref<144x256xf32, #tpu.memory_space<vmem>>, vector<12x256xf32>
    tpu.vector_store %arg10[%c96, %c0_28], %49 {strides = array<i32>} : memref<144x256xf32, #tpu.memory_space<vmem>>, vector<12x256xf32>,
    %c0_29 = arith.constant 0 : index
    %c0_30 = arith.constant 0 : index
    %51 = vector.load %arg3[%c0_29, %c0_30] : memref<12x108xf32, #tpu.memory_space<vmem>>, vector<12x108xf32>
    %c0_31 = arith.constant 0 : index
    %c0_32 = arith.constant 0 : index
    %52 = vector.load %arg10[%c0_31, %c0_32] : memref<144x256xf32, #tpu.memory_space<vmem>>, vector<108x256xf32>
    %cst = arith.constant dense<0.000000e+00> : vector<12x256xf32>
    %53 = tpu.matmul %51, %52, %cst {dimension_numbers = #tpu.dot_dimension_numbers<[1], [0], [0], [1], [0, 0, 1, 1], [], []>} : vector<12x108xf32>, vector<108x256xf32>, vector<12x256xf32> -> vector<12x256xf32>
    %c0_33 = arith.constant 0 : index
    %c0_34 = arith.constant 0 : index
    %54 = vector.load %arg4[%c0_33, %c0_34] : memref<12x1xf32, #tpu.memory_space<vmem>>, vector<12x1xf32>
    %55 = vector.broadcast %54 : vector<12x1xf32> to vector<12x256xf32>
    %56 = arith.addf %53, %55 : vector<12x256xf32>
    %c0_35 = arith.constant 0 : index
    %c0_36 = arith.constant 0 : index
    %57 = vector.load %arg5[%c0_35, %c0_36] : memref<4x12xf32, #tpu.memory_space<vmem>>, vector<4x12xf32>
    %cst_37 = arith.constant dense<0.000000e+00> : vector<4x256xf32>
    %58 = tpu.matmul %57, %56, %cst_37 {dimension_numbers = #tpu.dot_dimension_numbers<[1], [0], [0], [1], [0, 0, 1, 1], [], []>} : vector<4x12xf32>, vector<12x256xf32>, vector<4x256xf32> -> vector<4x256xf32>
    %c0_38 = arith.constant 0 : index
    %c0_39 = arith.constant 0 : index
    %59 = vector.load %arg6[%c0_38, %c0_39] : memref<4x1xf32, #tpu.memory_space<vmem>>, vector<4x1xf32>
    %60 = vector.broadcast %59 : vector<4x1xf32> to vector<4x256xf32>
    %61 = arith.addf %58, %60 : vector<4x256xf32>
    %c17_i32_40 = arith.constant 17 : i32
    %62 = tpu.dynamic_rotate %56 by %c17_i32_40 dim 1 : vector<12x256xf32>, i32 -> vector<12x256xf32>
    %63 = vector.broadcast %1 : vector<1x256xf32> to vector<12x256xf32>
    %64 = arith.mulf %62, %63 : vector<12x256xf32>
    %c0_41 = arith.constant 0 : index
    %c0_42 = arith.constant 0 : index
    %65 = vector.load %arg10[%c0_41, %c0_42] : memref<144x256xf32, #tpu.memory_space<vmem>>, vector<12x256xf32>
    tpu.vector_store %arg10[%c0_41, %c0_42], %64 {strides = array<i32>} : memref<144x256xf32, #tpu.memory_space<vmem>>, vector<12x256xf32>,
    %c16_i32_43 = arith.constant 16 : i32
    %66 = tpu.dynamic_rotate %56 by %c16_i32_43 dim 1 : vector<12x256xf32>, i32 -> vector<12x256xf32>
    %67 = vector.broadcast %3 : vector<1x256xf32> to vector<12x256xf32>
    %68 = arith.mulf %66, %67 : vector<12x256xf32>
    %c12_44 = arith.constant 12 : index
    %c0_45 = arith.constant 0 : index
    %69 = vector.load %arg10[%c12_44, %c0_45] : memref<144x256xf32, #tpu.memory_space<vmem>>, vector<12x256xf32>
    tpu.vector_store %arg10[%c12_44, %c0_45], %68 {strides = array<i32>} : memref<144x256xf32, #tpu.memory_space<vmem>>, vector<12x256xf32>,
    %c15_i32_46 = arith.constant 15 : i32
    %70 = tpu.dynamic_rotate %56 by %c15_i32_46 dim 1 : vector<12x256xf32>, i32 -> vector<12x256xf32>
    %71 = vector.broadcast %5 : vector<1x256xf32> to vector<12x256xf32>
    %72 = arith.mulf %70, %71 : vector<12x256xf32>
    %c24_47 = arith.constant 24 : index
    %c0_48 = arith.constant 0 : index
    %73 = vector.load %arg10[%c24_47, %c0_48] : memref<144x256xf32, #tpu.memory_space<vmem>>, vector<12x256xf32>
    tpu.vector_store %arg10[%c24_47, %c0_48], %72 {strides = array<i32>} : memref<144x256xf32, #tpu.memory_space<vmem>>, vector<12x256xf32>,
    %c1_i32_49 = arith.constant 1 : i32
    %74 = tpu.dynamic_rotate %56 by %c1_i32_49 dim 1 : vector<12x256xf32>, i32 -> vector<12x256xf32>
    %75 = vector.broadcast %7 : vector<1x256xf32> to vector<12x256xf32>
    %76 = arith.mulf %74, %75 : vector<12x256xf32>
    %c36_50 = arith.constant 36 : index
    %c0_51 = arith.constant 0 : index
    %77 = vector.load %arg10[%c36_50, %c0_51] : memref<144x256xf32, #tpu.memory_space<vmem>>, vector<12x256xf32>
    tpu.vector_store %arg10[%c36_50, %c0_51], %76 {strides = array<i32>} : memref<144x256xf32, #tpu.memory_space<vmem>>, vector<12x256xf32>,
    %c48_52 = arith.constant 48 : index
    %c0_53 = arith.constant 0 : index
    %78 = vector.load %arg10[%c48_52, %c0_53] : memref<144x256xf32, #tpu.memory_space<vmem>>, vector<12x256xf32>
    tpu.vector_store %arg10[%c48_52, %c0_53], %56 {strides = array<i32>} : memref<144x256xf32, #tpu.memory_space<vmem>>, vector<12x256xf32>,
    %c255_i32_54 = arith.constant 255 : i32
    %79 = tpu.dynamic_rotate %56 by %c255_i32_54 dim 1 : vector<12x256xf32>, i32 -> vector<12x256xf32>
    %80 = vector.broadcast %9 : vector<1x256xf32> to vector<12x256xf32>
    %81 = arith.mulf %79, %80 : vector<12x256xf32>
    %c60_55 = arith.constant 60 : index
    %c0_56 = arith.constant 0 : index
    %82 = vector.load %arg10[%c60_55, %c0_56] : memref<144x256xf32, #tpu.memory_space<vmem>>, vector<12x256xf32>
    tpu.vector_store %arg10[%c60_55, %c0_56], %81 {strides = array<i32>} : memref<144x256xf32, #tpu.memory_space<vmem>>, vector<12x256xf32>,
    %c241_i32_57 = arith.constant 241 : i32
    %83 = tpu.dynamic_rotate %56 by %c241_i32_57 dim 1 : vector<12x256xf32>, i32 -> vector<12x256xf32>
    %84 = vector.broadcast %11 : vector<1x256xf32> to vector<12x256xf32>
    %85 = arith.mulf %83, %84 : vector<12x256xf32>
    %c72_58 = arith.constant 72 : index
    %c0_59 = arith.constant 0 : index
    %86 = vector.load %arg10[%c72_58, %c0_59] : memref<144x256xf32, #tpu.memory_space<vmem>>, vector<12x256xf32>
    tpu.vector_store %arg10[%c72_58, %c0_59], %85 {strides = array<i32>} : memref<144x256xf32, #tpu.memory_space<vmem>>, vector<12x256xf32>,
    %c240_i32_60 = arith.constant 240 : i32
    %87 = tpu.dynamic_rotate %56 by %c240_i32_60 dim 1 : vector<12x256xf32>, i32 -> vector<12x256xf32>
    %88 = vector.broadcast %13 : vector<1x256xf32> to vector<12x256xf32>
    %89 = arith.mulf %87, %88 : vector<12x256xf32>
    %c84_61 = arith.constant 84 : index
    %c0_62 = arith.constant 0 : index
    %90 = vector.load %arg10[%c84_61, %c0_62] : memref<144x256xf32, #tpu.memory_space<vmem>>, vector<12x256xf32>
    tpu.vector_store %arg10[%c84_61, %c0_62], %89 {strides = array<i32>} : memref<144x256xf32, #tpu.memory_space<vmem>>, vector<12x256xf32>,
    %c239_i32_63 = arith.constant 239 : i32
    %91 = tpu.dynamic_rotate %56 by %c239_i32_63 dim 1 : vector<12x256xf32>, i32 -> vector<12x256xf32>
    %92 = vector.broadcast %15 : vector<1x256xf32> to vector<12x256xf32>
    %93 = arith.mulf %91, %92 : vector<12x256xf32>
    %c96_64 = arith.constant 96 : index
    %c0_65 = arith.constant 0 : index
    %94 = vector.load %arg10[%c96_64, %c0_65] : memref<144x256xf32, #tpu.memory_space<vmem>>, vector<12x256xf32>
    tpu.vector_store %arg10[%c96_64, %c0_65], %93 {strides = array<i32>} : memref<144x256xf32, #tpu.memory_space<vmem>>, vector<12x256xf32>,
    %c17_i32_66 = arith.constant 17 : i32
    %95 = tpu.dynamic_rotate %61 by %c17_i32_66 dim 1 : vector<4x256xf32>, i32 -> vector<4x256xf32>
    %96 = vector.broadcast %1 : vector<1x256xf32> to vector<4x256xf32>
    %97 = arith.mulf %95, %96 : vector<4x256xf32>
    %c108 = arith.constant 108 : index
    %c0_67 = arith.constant 0 : index
    %98 = vector.load %arg10[%c108, %c0_67] : memref<144x256xf32, #tpu.memory_space<vmem>>, vector<4x256xf32>
    tpu.vector_store %arg10[%c108, %c0_67], %97 {strides = array<i32>} : memref<144x256xf32, #tpu.memory_space<vmem>>, vector<4x256xf32>,
    %c16_i32_68 = arith.constant 16 : i32
    %99 = tpu.dynamic_rotate %61 by %c16_i32_68 dim 1 : vector<4x256xf32>, i32 -> vector<4x256xf32>
    %100 = vector.broadcast %3 : vector<1x256xf32> to vector<4x256xf32>
    %101 = arith.mulf %99, %100 : vector<4x256xf32>
    %c112 = arith.constant 112 : index
    %c0_69 = arith.constant 0 : index
    %102 = vector.load %arg10[%c112, %c0_69] : memref<144x256xf32, #tpu.memory_space<vmem>>, vector<4x256xf32>
    tpu.vector_store %arg10[%c112, %c0_69], %101 {strides = array<i32>} : memref<144x256xf32, #tpu.memory_space<vmem>>, vector<4x256xf32>,
    %c15_i32_70 = arith.constant 15 : i32
    %103 = tpu.dynamic_rotate %61 by %c15_i32_70 dim 1 : vector<4x256xf32>, i32 -> vector<4x256xf32>
    %104 = vector.broadcast %5 : vector<1x256xf32> to vector<4x256xf32>
    %105 = arith.mulf %103, %104 : vector<4x256xf32>
    %c116 = arith.constant 116 : index
    %c0_71 = arith.constant 0 : index
    %106 = vector.load %arg10[%c116, %c0_71] : memref<144x256xf32, #tpu.memory_space<vmem>>, vector<4x256xf32>
    tpu.vector_store %arg10[%c116, %c0_71], %105 {strides = array<i32>} : memref<144x256xf32, #tpu.memory_space<vmem>>, vector<4x256xf32>,
    %c1_i32_72 = arith.constant 1 : i32
    %107 = tpu.dynamic_rotate %61 by %c1_i32_72 dim 1 : vector<4x256xf32>, i32 -> vector<4x256xf32>
    %108 = vector.broadcast %7 : vector<1x256xf32> to vector<4x256xf32>
    %109 = arith.mulf %107, %108 : vector<4x256xf32>
    %c120 = arith.constant 120 : index
    %c0_73 = arith.constant 0 : index
    %110 = vector.load %arg10[%c120, %c0_73] : memref<144x256xf32, #tpu.memory_space<vmem>>, vector<4x256xf32>
    tpu.vector_store %arg10[%c120, %c0_73], %109 {strides = array<i32>} : memref<144x256xf32, #tpu.memory_space<vmem>>, vector<4x256xf32>,
    %c124 = arith.constant 124 : index
    %c0_74 = arith.constant 0 : index
    %111 = vector.load %arg10[%c124, %c0_74] : memref<144x256xf32, #tpu.memory_space<vmem>>, vector<4x256xf32>
    tpu.vector_store %arg10[%c124, %c0_74], %61 {strides = array<i32>} : memref<144x256xf32, #tpu.memory_space<vmem>>, vector<4x256xf32>,
    %c255_i32_75 = arith.constant 255 : i32
    %112 = tpu.dynamic_rotate %61 by %c255_i32_75 dim 1 : vector<4x256xf32>, i32 -> vector<4x256xf32>
    %113 = vector.broadcast %9 : vector<1x256xf32> to vector<4x256xf32>
    %114 = arith.mulf %112, %113 : vector<4x256xf32>
    %c128 = arith.constant 128 : index
    %c0_76 = arith.constant 0 : index
    %115 = vector.load %arg10[%c128, %c0_76] : memref<144x256xf32, #tpu.memory_space<vmem>>, vector<4x256xf32>
    tpu.vector_store %arg10[%c128, %c0_76], %114 {strides = array<i32>} : memref<144x256xf32, #tpu.memory_space<vmem>>, vector<4x256xf32>,
    %c241_i32_77 = arith.constant 241 : i32
    %116 = tpu.dynamic_rotate %61 by %c241_i32_77 dim 1 : vector<4x256xf32>, i32 -> vector<4x256xf32>
    %117 = vector.broadcast %11 : vector<1x256xf32> to vector<4x256xf32>
    %118 = arith.mulf %116, %117 : vector<4x256xf32>
    %c132 = arith.constant 132 : index
    %c0_78 = arith.constant 0 : index
    %119 = vector.load %arg10[%c132, %c0_78] : memref<144x256xf32, #tpu.memory_space<vmem>>, vector<4x256xf32>
    tpu.vector_store %arg10[%c132, %c0_78], %118 {strides = array<i32>} : memref<144x256xf32, #tpu.memory_space<vmem>>, vector<4x256xf32>,
    %c240_i32_79 = arith.constant 240 : i32
    %120 = tpu.dynamic_rotate %61 by %c240_i32_79 dim 1 : vector<4x256xf32>, i32 -> vector<4x256xf32>
    %121 = vector.broadcast %13 : vector<1x256xf32> to vector<4x256xf32>
    %122 = arith.mulf %120, %121 : vector<4x256xf32>
    %c136 = arith.constant 136 : index
    %c0_80 = arith.constant 0 : index
    %123 = vector.load %arg10[%c136, %c0_80] : memref<144x256xf32, #tpu.memory_space<vmem>>, vector<4x256xf32>
    tpu.vector_store %arg10[%c136, %c0_80], %122 {strides = array<i32>} : memref<144x256xf32, #tpu.memory_space<vmem>>, vector<4x256xf32>,
    %c239_i32_81 = arith.constant 239 : i32
    %124 = tpu.dynamic_rotate %61 by %c239_i32_81 dim 1 : vector<4x256xf32>, i32 -> vector<4x256xf32>
    %125 = vector.broadcast %15 : vector<1x256xf32> to vector<4x256xf32>
    %126 = arith.mulf %124, %125 : vector<4x256xf32>
    %c140 = arith.constant 140 : index
    %c0_82 = arith.constant 0 : index
    %127 = vector.load %arg10[%c140, %c0_82] : memref<144x256xf32, #tpu.memory_space<vmem>>, vector<4x256xf32>
    tpu.vector_store %arg10[%c140, %c0_82], %126 {strides = array<i32>} : memref<144x256xf32, #tpu.memory_space<vmem>>, vector<4x256xf32>,
    %c0_83 = arith.constant 0 : index
    %c0_84 = arith.constant 0 : index
    %128 = vector.load %arg7[%c0_83, %c0_84] : memref<12x144xf32, #tpu.memory_space<vmem>>, vector<12x144xf32>
    %c0_85 = arith.constant 0 : index
    %c0_86 = arith.constant 0 : index
    %129 = vector.load %arg10[%c0_85, %c0_86] : memref<144x256xf32, #tpu.memory_space<vmem>>, vector<144x256xf32>
    %cst_87 = arith.constant dense<0.000000e+00> : vector<12x256xf32>
    %130 = tpu.matmul %128, %129, %cst_87 {dimension_numbers = #tpu.dot_dimension_numbers<[1], [0], [0], [1], [0, 0, 1, 1], [], []>} : vector<12x144xf32>, vector<144x256xf32>, vector<12x256xf32> -> vector<12x256xf32>
    %c0_88 = arith.constant 0 : index
    %c0_89 = arith.constant 0 : index
    %131 = vector.load %arg8[%c0_88, %c0_89] : memref<12x1xf32, #tpu.memory_space<vmem>>, vector<12x1xf32>
    %132 = vector.broadcast %131 : vector<12x1xf32> to vector<12x256xf32>
    %133 = arith.addf %130, %132 : vector<12x256xf32>
    %134 = arith.addf %17, %133 : vector<12x256xf32>
    %c0_90 = arith.constant 0 : index
    %c0_91 = arith.constant 0 : index
    %c0_92 = arith.constant 0 : index
    %135 = vector.load %arg9[%c0_90, %c0_91, %c0_92] : memref<1x12x256xf32, #tpu.memory_space<vmem>>, vector<1x12x256xf32>
    %136 = vector.shape_cast %135 : vector<1x12x256xf32> to vector<12x256xf32>
    %137 = vector.shape_cast %134 : vector<12x256xf32> to vector<1x12x256xf32>
    tpu.vector_store %arg9[%c0_90, %c0_91, %c0_92], %137 {strides = array<i32>} : memref<1x12x256xf32, #tpu.memory_space<vmem>>, vector<1x12x256xf32>,
    return
  }
  func.func @transform_0(%arg0: i32) -> (i32, i32, i32) {
    %c0_i32 = arith.constant 0 : i32
    %c0_i32_0 = arith.constant 0 : i32
    %c0_i32_1 = arith.constant 0 : i32
    return %arg0, %c0_i32, %c0_i32_0 : i32, i32, i32
  }
  func.func @transform_1(%arg0: i32) -> (i32, i32, i32) {
    %c0_i32 = arith.constant 0 : i32
    %c0_i32_0 = arith.constant 0 : i32
    %c0_i32_1 = arith.constant 0 : i32
    %c0_i32_2 = arith.constant 0 : i32
    return %c0_i32, %c0_i32_0, %c0_i32_1 : i32, i32, i32
  }
  func.func @transform_2(%arg0: i32) -> (i32, i32) {
    %c0_i32 = arith.constant 0 : i32
    %c0_i32_0 = arith.constant 0 : i32
    %c0_i32_1 = arith.constant 0 : i32
    return %c0_i32, %c0_i32_0 : i32, i32
  }
  func.func @transform_3(%arg0: i32) -> (i32, i32) {
    %c0_i32 = arith.constant 0 : i32
    %c0_i32_0 = arith.constant 0 : i32
    %c0_i32_1 = arith.constant 0 : i32
    return %c0_i32, %c0_i32_0 : i32, i32
  }
  func.func @transform_4(%arg0: i32) -> (i32, i32) {
    %c0_i32 = arith.constant 0 : i32
    %c0_i32_0 = arith.constant 0 : i32
    %c0_i32_1 = arith.constant 0 : i32
    return %c0_i32, %c0_i32_0 : i32, i32
  }
  func.func @transform_5(%arg0: i32) -> (i32, i32) {
    %c0_i32 = arith.constant 0 : i32
    %c0_i32_0 = arith.constant 0 : i32
    %c0_i32_1 = arith.constant 0 : i32
    return %c0_i32, %c0_i32_0 : i32, i32
  }
  func.func @transform_6(%arg0: i32) -> (i32, i32) {
    %c0_i32 = arith.constant 0 : i32
    %c0_i32_0 = arith.constant 0 : i32
    %c0_i32_1 = arith.constant 0 : i32
    return %c0_i32, %c0_i32_0 : i32, i32
  }
  func.func @transform_7(%arg0: i32) -> (i32, i32) {
    %c0_i32 = arith.constant 0 : i32
    %c0_i32_0 = arith.constant 0 : i32
    %c0_i32_1 = arith.constant 0 : i32
    return %c0_i32, %c0_i32_0 : i32, i32
  }
  func.func @transform_8(%arg0: i32) -> (i32, i32, i32) {
    %c0_i32 = arith.constant 0 : i32
    %c0_i32_0 = arith.constant 0 : i32
    %c0_i32_1 = arith.constant 0 : i32
    return %arg0, %c0_i32, %c0_i32_0 : i32, i32, i32
  }
}

</mosaic_0001>

<llo_original>
// kernel: pfrb_forward.1
$region0: #{pfrb_forward.1}
  #allocation0 [shape = 'u32[]', space=smem, size = 0x4, offset = 0x4, fixed_abs, tag = 'smem constant byte address 0x4 - core index']
  #allocation1 [shape = 'u32[72,128]{1,0:T(1,128)}', space=vmem, size = 0x9000, scoped, tag = 'internal scratch']
  #allocation2 [shape = 'f32[144,256]{1,0:T(8,128)}', space=vmem, size = 0x24000, scoped, tag = 'scratch operand']
  %s0 = inlined_call_operand.vmem [shape: f32[2,12,256], index: 0, kind: input, shape index: {}]
  %s1 = inlined_call_operand.vmem [shape: f32[9,1,256], index: 1, kind: input, shape index: {}]
  %s2 = inlined_call_operand.vmem [shape: f32[12,108], index: 2, kind: input, shape index: {}]
  %s3 = inlined_call_operand.vmem [shape: f32[12,1], index: 3, kind: input, shape index: {}]
  %s4 = inlined_call_operand.vmem [shape: f32[4,12], index: 4, kind: input, shape index: {}]
  %s5 = inlined_call_operand.vmem [shape: f32[4,1], index: 5, kind: input, shape index: {}]
  %s6 = inlined_call_operand.vmem [shape: f32[12,144], index: 6, kind: input, shape index: {}]
  %s7 = inlined_call_operand.vmem [shape: f32[12,1], index: 7, kind: input, shape index: {}]
  %s8 = inlined_call_operand.vmem [shape: f32[2,12,256], index: 8, kind: output, shape index: {}]
  %s9 = sld [smem:[#allocation0]]
  $region65: #{pfrb_forward.1} parent=0
    _
  %s11 = ssub.s32 1, %s9
  %s12 = scalar_select 0, %s11, %s9
  loop: start=0, step=1, limit=4
  $region2: #{pfrb_forward.1} parent=0 // loop_pre_header
    _
  $region3: #{pfrb_forward.1} parent=0 // loop_header
    %s14 = sphi 0, %s18
    %p15 = scmp.ge.s32.totalorder %s14, 4
    %s24 = sphi 0, %s26
    %s27 = sphi 0, %s24
    %s28 = sphi 0, %s27
    %s44 = sphi 0, %s28
    %s48 = sphi 0, %s48
    %s50 = sphi 0, %s48
    %s51 = sphi 0, %s50
    %s65 = sphi 0, %s51
    %s69 = sphi 0, %s69
    %s71 = sphi 0, %s69
    %s72 = sphi 0, %s71
    %s86 = sphi 0, %s72
    %s90 = sphi 0, %s90
    %s92 = sphi 0, %s90
    %s93 = sphi 0, %s92
    %s107 = sphi 0, %s93
    %s111 = sphi 0, %s111
    %s113 = sphi 0, %s111
    %s114 = sphi 0, %s113
    %s128 = sphi 0, %s114
    %s132 = sphi 0, %s132
    %s134 = sphi 0, %s132
    %s135 = sphi 0, %s134
    %s149 = sphi 0, %s135
    %s153 = sphi 0, %s153
    %s155 = sphi 0, %s153
    %s156 = sphi 0, %s155
    %s170 = sphi 0, %s156
    %s174 = sphi 0, %s174
    %s176 = sphi 0, %s174
    %s177 = sphi 0, %s176
    %s191 = sphi 0, %s177
    %s197 = sphi 0, %s199
    %s200 = sphi 0, %s197
    %s201 = sphi 0, %s200
    %s217 = sphi 0, %s201
  $region4: #{pfrb_forward.1} parent=0 // loop_header_branch
    %17 = sbr.rel (%p15) target = $region8
  $region5: #{pfrb_forward.1} parent=0 // loop_body
    %s19 = ssub.s32 %s14, 1
    %s20 = ssub.s32 %s14, 2
    %s21 = sadd.s32 %s14, 1
    %s22 = ssub.s32 %s14, %s21
    %p23 = scmp.eq.s32.totalorder %s22, 0
    %s25 = sadd.s32 %s24, 1
    %s26 = scalar_select %p23, %s24, %s25
    %p29 = pneg %p23
    %p30 = scmp.eq.s32.totalorder %s14, 1
    %p31 = por %p29, %p30
    %p32 = scmp.ne.s32.totalorder %s24, %s27
    %p33 = scmp.eq.s32.totalorder %s14, 0
    %p34 = por %p32, %p33
    %p35 = scmp.ne.s32.totalorder %s24, %s27
    %p36 = scmp.eq.s32.totalorder %s19, 1
    %p37 = por %p35, %p36
    %p38 = scmp.ne.s32.totalorder %s27, %s28
    %p39 = scmp.eq.s32.totalorder %s19, 0
    %p40 = por %p38, %p39
    %p41 = scmp.ne.s32.totalorder %s27, %s28
    %p42 = scmp.eq.s32.totalorder %s20, 1
    %p43 = por %p41, %p42
    %p45 = scmp.ne.s32.totalorder %s28, %s44
    %p46 = scmp.eq.s32.totalorder %s20, 0
    %p47 = por %p45, %p46
    %s49 = sadd.s32 %s48, 1
    %p52 = scmp.eq.s32.totalorder %s14, 1
    %p53 = scmp.ne.s32.totalorder %s48, %s50
    %p54 = scmp.eq.s32.totalorder %s14, 0
    %p55 = por %p53, %p54
    %p56 = scmp.ne.s32.totalorder %s48, %s50
    %p57 = scmp.eq.s32.totalorder %s19, 1
    %p58 = por %p56, %p57
    %p59 = scmp.ne.s32.totalorder %s50, %s51
    %p60 = scmp.eq.s32.totalorder %s19, 0
    %p61 = por %p59, %p60
    %p62 = scmp.ne.s32.totalorder %s50, %s51
    %p63 = scmp.eq.s32.totalorder %s20, 1
    %p64 = por %p62, %p63
    %p66 = scmp.ne.s32.totalorder %s51, %s65
    %p67 = scmp.eq.s32.totalorder %s20, 0
    %p68 = por %p66, %p67
    %s70 = sadd.s32 %s69, 1
    %p73 = scmp.eq.s32.totalorder %s14, 1
    %p74 = scmp.ne.s32.totalorder %s69, %s71
    %p75 = scmp.eq.s32.totalorder %s14, 0
    %p76 = por %p74, %p75
    %p77 = scmp.ne.s32.totalorder %s69, %s71
    %p78 = scmp.eq.s32.totalorder %s19, 1
    %p79 = por %p77, %p78
    %p80 = scmp.ne.s32.totalorder %s71, %s72
    %p81 = scmp.eq.s32.totalorder %s19, 0
    %p82 = por %p80, %p81
    %p83 = scmp.ne.s32.totalorder %s71, %s72
    %p84 = scmp.eq.s32.totalorder %s20, 1
    %p85 = por %p83, %p84
    %p87 = scmp.ne.s32.totalorder %s72, %s86
    %p88 = scmp.eq.s32.totalorder %s20, 0
    %p89 = por %p87, %p88
    %s91 = sadd.s32 %s90, 1
    %p94 = scmp.eq.s32.totalorder %s14, 1
    %p95 = scmp.ne.s32.totalorder %s90, %s92
    %p96 = scmp.eq.s32.totalorder %s14, 0
    %p97 = por %p95, %p96
    %p98 = scmp.ne.s32.totalorder %s90, %s92
    %p99 = scmp.eq.s32.totalorder %s19, 1
    %p100 = por %p98, %p99
    %p101 = scmp.ne.s32.totalorder %s92, %s93
    %p102 = scmp.eq.s32.totalorder %s19, 0
    %p103 = por %p101, %p102
    %p104 = scmp.ne.s32.totalorder %s92, %s93
    %p105 = scmp.eq.s32.totalorder %s20, 1
    %p106 = por %p104, %p105
    %p108 = scmp.ne.s32.totalorder %s93, %s107
    %p109 = scmp.eq.s32.totalorder %s20, 0
    %p110 = por %p108, %p109
    %s112 = sadd.s32 %s111, 1
    %p115 = scmp.eq.s32.totalorder %s14, 1
    %p116 = scmp.ne.s32.totalorder %s111, %s113
    %p117 = scmp.eq.s32.totalorder %s14, 0
    %p118 = por %p116, %p117
    %p119 = scmp.ne.s32.totalorder %s111, %s113
    %p120 = scmp.eq.s32.totalorder %s19, 1
    %p121 = por %p119, %p120
    %p122 = scmp.ne.s32.totalorder %s113, %s114
    %p123 = scmp.eq.s32.totalorder %s19, 0
    %p124 = por %p122, %p123
    %p125 = scmp.ne.s32.totalorder %s113, %s114
    %p126 = scmp.eq.s32.totalorder %s20, 1
    %p127 = por %p125, %p126
    %p129 = scmp.ne.s32.totalorder %s114, %s128
    %p130 = scmp.eq.s32.totalorder %s20, 0
    %p131 = por %p129, %p130
    %s133 = sadd.s32 %s132, 1
    %p136 = scmp.eq.s32.totalorder %s14, 1
    %p137 = scmp.ne.s32.totalorder %s132, %s134
    %p138 = scmp.eq.s32.totalorder %s14, 0
    %p139 = por %p137, %p138
    %p140 = scmp.ne.s32.totalorder %s132, %s134
    %p141 = scmp.eq.s32.totalorder %s19, 1
    %p142 = por %p140, %p141
    %p143 = scmp.ne.s32.totalorder %s134, %s135
    %p144 = scmp.eq.s32.totalorder %s19, 0
    %p145 = por %p143, %p144
    %p146 = scmp.ne.s32.totalorder %s134, %s135
    %p147 = scmp.eq.s32.totalorder %s20, 1
    %p148 = por %p146, %p147
    %p150 = scmp.ne.s32.totalorder %s135, %s149
    %p151 = scmp.eq.s32.totalorder %s20, 0
    %p152 = por %p150, %p151
    %s154 = sadd.s32 %s153, 1
    %p157 = scmp.eq.s32.totalorder %s14, 1
    %p158 = scmp.ne.s32.totalorder %s153, %s155
    %p159 = scmp.eq.s32.totalorder %s14, 0
    %p160 = por %p158, %p159
    %p161 = scmp.ne.s32.totalorder %s153, %s155
    %p162 = scmp.eq.s32.totalorder %s19, 1
    %p163 = por %p161, %p162
    %p164 = scmp.ne.s32.totalorder %s155, %s156
    %p165 = scmp.eq.s32.totalorder %s19, 0
    %p166 = por %p164, %p165
    %p167 = scmp.ne.s32.totalorder %s155, %s156
    %p168 = scmp.eq.s32.totalorder %s20, 1
    %p169 = por %p167, %p168
    %p171 = scmp.ne.s32.totalorder %s156, %s170
    %p172 = scmp.eq.s32.totalorder %s20, 0
    %p173 = por %p171, %p172
    %s175 = sadd.s32 %s174, 1
    %p178 = scmp.eq.s32.totalorder %s14, 1
    %p179 = scmp.ne.s32.totalorder %s174, %s176
    %p180 = scmp.eq.s32.totalorder %s14, 0
    %p181 = por %p179, %p180
    %p182 = scmp.ne.s32.totalorder %s174, %s176
    %p183 = scmp.eq.s32.totalorder %s19, 1
    %p184 = por %p182, %p183
    %p185 = scmp.ne.s32.totalorder %s176, %s177
    %p186 = scmp.eq.s32.totalorder %s19, 0
    %p187 = por %p185, %p186
    %p188 = scmp.ne.s32.totalorder %s176, %s177
    %p189 = scmp.eq.s32.totalorder %s20, 1
    %p190 = por %p188, %p189
    %p192 = scmp.ne.s32.totalorder %s177, %s191
    %p193 = scmp.eq.s32.totalorder %s20, 0
    %p194 = por %p192, %p193
    %s195 = ssub.s32 %s14, %s21
    %p196 = scmp.eq.s32.totalorder %s195, 0
    %s198 = sadd.s32 %s197, 1
    %s199 = scalar_select %p196, %s197, %s198
    %p202 = pneg %p196
    %p203 = scmp.eq.s32.totalorder %s14, 1
    %p204 = por %p202, %p203
    %p205 = scmp.ne.s32.totalorder %s197, %s200
    %p206 = scmp.eq.s32.totalorder %s14, 0
    %p207 = por %p205, %p206
    %p208 = scmp.ne.s32.totalorder %s197, %s200
    %p209 = scmp.eq.s32.totalorder %s19, 1
    %p210 = por %p208, %p209
    %p211 = scmp.ne.s32.totalorder %s200, %s201
    %p212 = scmp.eq.s32.totalorder %s19, 0
    %p213 = por %p211, %p212
    %p214 = scmp.ne.s32.totalorder %s200, %s201
    %p215 = scmp.eq.s32.totalorder %s20, 1
    %p216 = por %p214, %p215
    %p218 = scmp.ne.s32.totalorder %s201, %s217
    %p219 = scmp.eq.s32.totalorder %s20, 0
    %p220 = por %p218, %p219
    %p221 = scmp.le.s32.totalorder 1, %s14
    %p222 = scmp.lt.s32.totalorder %s14, 3
    %p223 = pnand %p221, %p222
    %p224 = pneg %p223
    // Predicated region
    $region9: #{pfrb_forward.1} parent=5 // pred_check
      _
    $region10: #{pfrb_forward.1} parent=5 // pred_check_branch
      %226 = sbr.rel (%p223) target = $region12
    $region11: #{pfrb_forward.1} parent=5 // pred_region
      %s227 = ssub.s32 %s14, 1
      // Predicated region
      $region13: #{pfrb_forward.1} parent=11 // pred_check
        %p228 = pneg %p61
      $region14: #{pfrb_forward.1} parent=11 // pred_check_branch
        %230 = sbr.rel (%p228) target = $region16
      $region15: #{pfrb_forward.1} parent=11 // pred_region
        _
      $region16: #{pfrb_forward.1} parent=11 // pred_fallthru
        _
      // Predicated region
      $region17: #{pfrb_forward.1} parent=11 // pred_check
        %p231 = pneg %p82
      $region18: #{pfrb_forward.1} parent=11 // pred_check_branch
        %233 = sbr.rel (%p231) target = $region20
      $region19: #{pfrb_forward.1} parent=11 // pred_region
        _
      $region20: #{pfrb_forward.1} parent=11 // pred_fallthru
        _
      // Predicated region
      $region21: #{pfrb_forward.1} parent=11 // pred_check
        %p234 = pneg %p103
      $region22: #{pfrb_forward.1} parent=11 // pred_check_branch
        %236 = sbr.rel (%p234) target = $region24
      $region23: #{pfrb_forward.1} parent=11 // pred_region
        _
      $region24: #{pfrb_forward.1} parent=11 // pred_fallthru
        _
      // Predicated region
      $region25: #{pfrb_forward.1} parent=11 // pred_check
        %p237 = pneg %p124
      $region26: #{pfrb_forward.1} parent=11 // pred_check_branch
        %239 = sbr.rel (%p237) target = $region28
      $region27: #{pfrb_forward.1} parent=11 // pred_region
        _
      $region28: #{pfrb_forward.1} parent=11 // pred_fallthru
        _
      // Predicated region
      $region29: #{pfrb_forward.1} parent=11 // pred_check
        %p240 = pneg %p145
      $region30: #{pfrb_forward.1} parent=11 // pred_check_branch
        %242 = sbr.rel (%p240) target = $region32
      $region31: #{pfrb_forward.1} parent=11 // pred_region
        _
      $region32: #{pfrb_forward.1} parent=11 // pred_fallthru
        _
      // Predicated region
      $region33: #{pfrb_forward.1} parent=11 // pred_check
        %p243 = pneg %p166
      $region34: #{pfrb_forward.1} parent=11 // pred_check_branch
        %245 = sbr.rel (%p243) target = $region36
      $region35: #{pfrb_forward.1} parent=11 // pred_region
        _
      $region36: #{pfrb_forward.1} parent=11 // pred_fallthru
        _
      // Predicated region
      $region37: #{pfrb_forward.1} parent=11 // pred_check
        %p246 = pneg %p187
      $region38: #{pfrb_forward.1} parent=11 // pred_check_branch
        %248 = sbr.rel (%p246) target = $region40
      $region39: #{pfrb_forward.1} parent=11 // pred_region
        _
      $region40: #{pfrb_forward.1} parent=11 // pred_fallthru
        _
    $region12: #{pfrb_forward.1} parent=5 // pred_fallthru
      _
    %p249 = scmp.lt.s32.totalorder %s14, 2
    // Predicated region
    $region41: #{pfrb_forward.1} parent=5 // pred_check
      %p250 = pneg %p249
    $region42: #{pfrb_forward.1} parent=5 // pred_check_branch
      %252 = sbr.rel (%p250) target = $region44
    $region43: #{pfrb_forward.1} parent=5 // pred_region
      // Predicated region
      $region45: #{pfrb_forward.1} parent=43 // pred_check
        %p253 = pneg %p34
      $region46: #{pfrb_forward.1} parent=43 // pred_check_branch
        %255 = sbr.rel (%p253) target = $region48
      $region47: #{pfrb_forward.1} parent=43 // pred_region
        %p256 = scmp.lt.s32.totalorder %s14, 1
        %s257 = scalar_select %p256, %s14, 1
        %s258 = smul.addr %s257, 4
        %s259 = smul.addr %s258, 8
        %s260 = scalar_lea.vmem %s0, %s259
      $region48: #{pfrb_forward.1} parent=43 // pred_fallthru
        _
    $region44: #{pfrb_forward.1} parent=5 // pred_fallthru
      _
    %p261 = scmp.le.s32.totalorder 1, %s14
    %p262 = scmp.lt.s32.totalorder %s14, 3
    %p263 = pnand %p261, %p262
    %p264 = pneg %p263
    // Predicated region
    $region49: #{pfrb_forward.1} parent=5 // pred_check
      _
    $region50: #{pfrb_forward.1} parent=5 // pred_check_branch
      %266 = sbr.rel (%p263) target = $region52
    $region51: #{pfrb_forward.1} parent=5 // pred_region
      %s267 = ssub.s32 %s14, 1
      %p268 = scmp.lt.s32.totalorder %s19, 1
      %s269 = scalar_select %p268, %s19, 1
      %s270 = smul.addr %s269, 4
      %s271 = smul.addr %s270, 8
      %s272 = scalar_lea.vmem %s0, %s271
      %p273 = pneg %p40
      %p274 = pneg %p37
      %p275 = pneg %p61
      %p276 = pneg %p58
      %p277 = pneg %p82
      %p278 = pneg %p79
      %p279 = pneg %p103
      %p280 = pneg %p100
      %p281 = pneg %p124
      %p282 = pneg %p121
      %p283 = pneg %p145
      %p284 = pneg %p142
      %p285 = pneg %p166
      %p286 = pneg %p163
      %p287 = pneg %p187
      %p288 = pneg %p184
      %p289 = pneg %p213
      %p290 = pneg %p210
      %p291 = scmp.lt.s32.totalorder %s19, 1
      %s292 = scalar_select %p291, %s19, 1
      %s293 = smul.addr %s292, 4
      %s294 = smul.addr %s293, 8
      %s295 = scalar_lea.vmem %s8, %s294
      %p296 = scmp.lt.s32.totalorder %s19, 1
      %s297 = scalar_select %p296, %s19, 1
      %s298 = smul.addr %s297, 4
      %s299 = smul.addr %s298, 8
      %s300 = scalar_lea.vmem %s0, %s299
      %p301 = scmp.lt.s32.totalorder %s19, 1
      %s302 = scalar_select %p301, %s19, 1
      %s303 = smul.addr %s302, 4
      %s304 = smul.addr %s303, 8
      %s305 = scalar_lea.vmem %s8, %s304
      %v306 = vld [vmem:[%s1] sm:$0x3]
      %s307 = scalar_lea.vmem %s1, 2
      %v308 = vld [vmem:[%s307] sm:$0x3]
      %s309 = scalar_lea.vmem %s1, 4
      %v310 = vld [vmem:[%s309] sm:$0x3]
      %s311 = scalar_lea.vmem %s1, 6
      %v312 = vld [vmem:[%s311] sm:$0x3]
      %s313 = scalar_lea.vmem %s1, 10
      %v314 = vld [vmem:[%s313] sm:$0x3]
      %s315 = scalar_lea.vmem %s1, 12
      %v316 = vld [vmem:[%s315] sm:$0x3]
      %s317 = scalar_lea.vmem %s1, 14
      %v318 = vld [vmem:[%s317] sm:$0x3]
      %s319 = scalar_lea.vmem %s1, 16
      %v320 = vld [vmem:[%s319] sm:$0x3]
      %v321 = vld [vmem:[%s300] sm:$0xff]
      %v322 = vld [vmem:[%s300 + $0x8] sm:$0xff]
      %v323 = vld [vmem:[%s300 + $0x10] sm:$0xf]
      %v324 = vld [vmem:[%s300 + $0x18] sm:$0xf]
      %325 = vrot.lane.b32.xlu0 %v321, 17
      %v326 = vpop.permute.xlu0 %325
      %327 = vrot.lane.b32.xlu0 %v323, 17
      %v328 = vpop.permute.xlu0 %327
      %329 = vrot.lane.b32.xlu0 %v322, 17
      %v330 = vpop.permute.xlu0 %329
      %331 = vrot.lane.b32.xlu0 %v324, 17
      %v332 = vpop.permute.xlu0 %331
      %v333 = vlaneseq
      %v334 = vand.u32 %v333, 127
      %vm335 = vcmp.lt.s32.totalorder %v334, 17
      %v336 = vsel %vm335, %v326, %v330
      %v337 = vsel %vm335, %v328, %v332
      %v338 = vsel %vm335, %v330, %v326
      %v339 = vsel %vm335, %v332, %v328
      %v341 = vperm.slane %v306, 0
      %v342 = vperm.slane %v306, 1
      %v345 = vmul.f32 %v338, %v341
      %v346 = vmul.f32 %v336, %v342
      %v347 = vmul.f32 %v339, %v341
      %v348 = vmul.f32 %v337, %v342
      %349 = vst [vmem:[#allocation2] sm:$0xff] %v345
      %350 = vst [vmem:[#allocation2 + $0x8] sm:$0xff] %v346
      %351 = vst [vmem:[#allocation2 + $0x10] sm:$0xf] %v347
      %352 = vst [vmem:[#allocation2 + $0x18] sm:$0xf] %v348
      %353 = vrot.lane.b32.xlu0 %v321, 16
      %v354 = vpop.permute.xlu0 %353
      %355 = vrot.lane.b32.xlu0 %v323, 16
      %v356 = vpop.permute.xlu0 %355
      %357 = vrot.lane.b32.xlu0 %v322, 16
      %v358 = vpop.permute.xlu0 %357
      %359 = vrot.lane.b32.xlu0 %v324, 16
      %v360 = vpop.permute.xlu0 %359
      %vm361 = vcmp.lt.s32.totalorder %v334, 16
      %v362 = vsel %vm361, %v354, %v358
      %v363 = vsel %vm361, %v356, %v360
      %v364 = vsel %vm361, %v358, %v354
      %v365 = vsel %vm361, %v360, %v356
      %v367 = vperm.slane %v308, 0
      %v368 = vperm.slane %v308, 1
      %v371 = vmul.f32 %v364, %v367
      %v372 = vmul.f32 %v362, %v368
      %v373 = vmul.f32 %v365, %v367
      %v374 = vmul.f32 %v363, %v368
      %vm379 = vcmask 1043456
      %v380 = vrot.slane %v371, 4
      %v381 = vrot.slane %v372, 4
      %v382 = vrot.slane %v373, 4
      %v383 = vsel %vm379, %v380, %v382
      %v384 = vrot.slane %v374, 4
      %v385 = vsel %vm379, %v381, %v384
      %390 = vst [vmem:[#allocation2 + $0x10] sm:$0xf0] %v380
      %391 = vst [vmem:[#allocation2 + $0x18] sm:$0xf0] %v381
      %392 = vst [vmem:[#allocation2 + $0x20] sm:$0xff] %v383
      %393 = vst [vmem:[#allocation2 + $0x28] sm:$0xff] %v385
      %394 = vrot.lane.b32.xlu0 %v321, 15
      %v395 = vpop.permute.xlu0 %394
      %396 = vrot.lane.b32.xlu0 %v323, 15
      %v397 = vpop.permute.xlu0 %396
      %398 = vrot.lane.b32.xlu0 %v322, 15
      %v399 = vpop.permute.xlu0 %398
      %400 = vrot.lane.b32.xlu0 %v324, 15
      %v401 = vpop.permute.xlu0 %400
      %vm402 = vcmp.lt.s32.totalorder %v334, 15
      %v403 = vsel %vm402, %v395, %v399
      %v404 = vsel %vm402, %v397, %v401
      %v405 = vsel %vm402, %v399, %v395
      %v406 = vsel %vm402, %v401, %v397
      %v408 = vperm.slane %v310, 0
      %v409 = vperm.slane %v310, 1
      %v412 = vmul.f32 %v405, %v408
      %v413 = vmul.f32 %v403, %v409
      %v414 = vmul.f32 %v406, %v408
      %v415 = vmul.f32 %v404, %v409
      %416 = vst [vmem:[#allocation2 + $0x30] sm:$0xff] %v412
      %417 = vst [vmem:[#allocation2 + $0x38] sm:$0xff] %v413
      %418 = vst [vmem:[#allocation2 + $0x40] sm:$0xf] %v414
      %419 = vst [vmem:[#allocation2 + $0x48] sm:$0xf] %v415
      %420 = vrot.lane.b32.xlu0 %v321, 1
      %v421 = vpop.permute.xlu0 %420
      %422 = vrot.lane.b32.xlu0 %v323, 1
      %v423 = vpop.permute.xlu0 %422
      %424 = vrot.lane.b32.xlu0 %v322, 1
      %v425 = vpop.permute.xlu0 %424
      %426 = vrot.lane.b32.xlu0 %v324, 1
      %v427 = vpop.permute.xlu0 %426
      %vm428 = vcmp.lt.s32.totalorder %v334, 1
      %v429 = vsel %vm428, %v421, %v425
      %v430 = vsel %vm428, %v423, %v427
      %v431 = vsel %vm428, %v425, %v421
      %v432 = vsel %vm428, %v427, %v423
      %v434 = vperm.slane %v312, 0
      %v435 = vperm.slane %v312, 1
      %v438 = vmul.f32 %v431, %v434
      %v439 = vmul.f32 %v429, %v435
      %v440 = vmul.f32 %v432, %v434
      %v441 = vmul.f32 %v430, %v435
      %v446 = vrot.slane %v438, 4
      %v447 = vrot.slane %v439, 4
      %v448 = vrot.slane %v440, 4
      %v449 = vsel %vm379, %v446, %v448
      %v450 = vrot.slane %v441, 4
      %v451 = vsel %vm379, %v447, %v450
      %456 = vst [vmem:[#allocation2 + $0x40] sm:$0xf0] %v446
      %457 = vst [vmem:[#allocation2 + $0x48] sm:$0xf0] %v447
      %458 = vst [vmem:[#allocation2 + $0x50] sm:$0xff] %v449
      %459 = vst [vmem:[#allocation2 + $0x58] sm:$0xff] %v451
      %460 = vst [vmem:[#allocation2 + $0x60] sm:$0xff] %v321
      %461 = vst [vmem:[#allocation2 + $0x68] sm:$0xff] %v322
      %462 = vst [vmem:[#allocation2 + $0x70] sm:$0xf] %v323
      %463 = vst [vmem:[#allocation2 + $0x78] sm:$0xf] %v324
      %464 = vrot.lane.b32.xlu0 %v321, 127
      %v465 = vpop.permute.xlu0 %464
      %466 = vrot.lane.b32.xlu0 %v323, 127
      %v467 = vpop.permute.xlu0 %466
      %468 = vrot.lane.b32.xlu0 %v322, 127
      %v469 = vpop.permute.xlu0 %468
      %470 = vrot.lane.b32.xlu0 %v324, 127
      %v471 = vpop.permute.xlu0 %470
      %vm472 = vcmp.lt.s32.totalorder %v334, 127
      %v473 = vsel %vm472, %v465, %v469
      %v474 = vsel %vm472, %v467, %v471
      %v475 = vsel %vm472, %v469, %v465
      %v476 = vsel %vm472, %v471, %v467
      %v478 = vperm.slane %v314, 0
      %v479 = vperm.slane %v314, 1
      %v482 = vmul.f32 %v473, %v478
      %v483 = vmul.f32 %v475, %v479
      %v484 = vmul.f32 %v474, %v478
      %v485 = vmul.f32 %v476, %v479
      %v490 = vrot.slane %v482, 4
      %v491 = vrot.slane %v483, 4
      %v492 = vrot.slane %v484, 4
      %v493 = vsel %vm379, %v490, %v492
      %v494 = vrot.slane %v485, 4
      %v495 = vsel %vm379, %v491, %v494
      %500 = vst [vmem:[#allocation2 + $0x70] sm:$0xf0] %v490
      %501 = vst [vmem:[#allocation2 + $0x78] sm:$0xf0] %v491
      %502 = vst [vmem:[#allocation2 + $0x80] sm:$0xff] %v493
      %503 = vst [vmem:[#allocation2 + $0x88] sm:$0xff] %v495
      %504 = vrot.lane.b32.xlu0 %v321, 113
      %v505 = vpop.permute.xlu0 %504
      %506 = vrot.lane.b32.xlu0 %v323, 113
      %v507 = vpop.permute.xlu0 %506
      %508 = vrot.lane.b32.xlu0 %v322, 113
      %v509 = vpop.permute.xlu0 %508
      %510 = vrot.lane.b32.xlu0 %v324, 113
      %v511 = vpop.permute.xlu0 %510
      %vm512 = vcmp.lt.s32.totalorder %v334, 113
      %v513 = vsel %vm512, %v505, %v509
      %v514 = vsel %vm512, %v507, %v511
      %v515 = vsel %vm512, %v509, %v505
      %v516 = vsel %vm512, %v511, %v507
      %v518 = vperm.slane %v316, 0
      %v519 = vperm.slane %v316, 1
      %v522 = vmul.f32 %v513, %v518
      %v523 = vmul.f32 %v515, %v519
      %v524 = vmul.f32 %v514, %v518
      %v525 = vmul.f32 %v516, %v519
      %526 = vst [vmem:[#allocation2 + $0x90] sm:$0xff] %v522
      %527 = vst [vmem:[#allocation2 + $0x98] sm:$0xff] %v523
      %528 = vst [vmem:[#allocation2 + $0xa0] sm:$0xf] %v524
      %529 = vst [vmem:[#allocation2 + $0xa8] sm:$0xf] %v525
      %530 = vrot.lane.b32.xlu0 %v321, 112
      %v531 = vpop.permute.xlu0 %530
      %532 = vrot.lane.b32.xlu0 %v323, 112
      %v533 = vpop.permute.xlu0 %532
      %534 = vrot.lane.b32.xlu0 %v322, 112
      %v535 = vpop.permute.xlu0 %534
      %536 = vrot.lane.b32.xlu0 %v324, 112
      %v537 = vpop.permute.xlu0 %536
      %vm538 = vcmp.lt.s32.totalorder %v334, 112
      %v539 = vsel %vm538, %v531, %v535
      %v540 = vsel %vm538, %v533, %v537
      %v541 = vsel %vm538, %v535, %v531
      %v542 = vsel %vm538, %v537, %v533
      %v544 = vperm.slane %v318, 0
      %v545 = vperm.slane %v318, 1
      %v548 = vmul.f32 %v539, %v544
      %v549 = vmul.f32 %v541, %v545
      %v550 = vmul.f32 %v540, %v544
      %v551 = vmul.f32 %v542, %v545
      %v556 = vrot.slane %v548, 4
      %v557 = vrot.slane %v549, 4
      %v558 = vrot.slane %v550, 4
      %v559 = vsel %vm379, %v556, %v558
      %v560 = vrot.slane %v551, 4
      %v561 = vsel %vm379, %v557, %v560
      %566 = vst [vmem:[#allocation2 + $0xa0] sm:$0xf0] %v556
      %567 = vst [vmem:[#allocation2 + $0xa8] sm:$0xf0] %v557
      %568 = vst [vmem:[#allocation2 + $0xb0] sm:$0xff] %v559
      %569 = vst [vmem:[#allocation2 + $0xb8] sm:$0xff] %v561
      %570 = vrot.lane.b32.xlu0 %v321, 111
      %v571 = vpop.permute.xlu0 %570
      %572 = vrot.lane.b32.xlu0 %v323, 111
      %v573 = vpop.permute.xlu0 %572
      %574 = vrot.lane.b32.xlu0 %v322, 111
      %v575 = vpop.permute.xlu0 %574
      %576 = vrot.lane.b32.xlu0 %v324, 111
      %v577 = vpop.permute.xlu0 %576
      %vm578 = vcmp.lt.s32.totalorder %v334, 111
      %v579 = vsel %vm578, %v571, %v575
      %v580 = vsel %vm578, %v573, %v577
      %v581 = vsel %vm578, %v575, %v571
      %v582 = vsel %vm578, %v577, %v573
      %v584 = vperm.slane %v320, 0
      %v585 = vperm.slane %v320, 1
      %v588 = vmul.f32 %v579, %v584
      %v589 = vmul.f32 %v581, %v585
      %v590 = vmul.f32 %v580, %v584
      %v591 = vmul.f32 %v582, %v585
      %592 = vst [vmem:[#allocation2 + $0xc0] sm:$0xff] %v588
      %593 = vst [vmem:[#allocation2 + $0xc8] sm:$0xff] %v589
      %594 = vst [vmem:[#allocation2 + $0xd0] sm:$0xf] %v590
      %595 = vst [vmem:[#allocation2 + $0xd8] sm:$0xf] %v591
      %v596 = vld [vmem:[%s2] sm:$0xff]
      %v597 = vld [vmem:[%s2 + $0x8] sm:$0xf]
      %v598 = vld [vmem:[#allocation2] sm:$0xff]
      %v599 = vld [vmem:[#allocation2 + $0x8] sm:$0xff]
      %v600 = vld [vmem:[#allocation2 + $0x10] sm:$0xff]
      %v601 = vld [vmem:[#allocation2 + $0x18] sm:$0xff]
      %v602 = vld [vmem:[#allocation2 + $0x20] sm:$0xff]
      %v603 = vld [vmem:[#allocation2 + $0x28] sm:$0xff]
      %v604 = vld [vmem:[#allocation2 + $0x30] sm:$0xff]
      %v605 = vld [vmem:[#allocation2 + $0x38] sm:$0xff]
      %v606 = vld [vmem:[#allocation2 + $0x40] sm:$0xff]
      %v607 = vld [vmem:[#allocation2 + $0x48] sm:$0xff]
      %v608 = vld [vmem:[#allocation2 + $0x50] sm:$0xff]
      %v609 = vld [vmem:[#allocation2 + $0x58] sm:$0xff]
      %v610 = vld [vmem:[#allocation2 + $0x60] sm:$0xff]
      %v611 = vld [vmem:[#allocation2 + $0x68] sm:$0xff]
      %v612 = vld [vmem:[#allocation2 + $0x70] sm:$0xff]
      %v613 = vld [vmem:[#allocation2 + $0x78] sm:$0xff]
      %v614 = vld [vmem:[#allocation2 + $0x80] sm:$0xff]
      %v615 = vld [vmem:[#allocation2 + $0x88] sm:$0xff]
      %v616 = vld [vmem:[#allocation2 + $0x90] sm:$0xff]
      %v617 = vld [vmem:[#allocation2 + $0x98] sm:$0xff]
      %v618 = vld [vmem:[#allocation2 + $0xa0] sm:$0xff]
      %v619 = vld [vmem:[#allocation2 + $0xa8] sm:$0xff]
      %v620 = vld [vmem:[#allocation2 + $0xb0] sm:$0xff]
      %v621 = vld [vmem:[#allocation2 + $0xb8] sm:$0xff]
      %v622 = vld [vmem:[#allocation2 + $0xc0] sm:$0xff]
      %v623 = vld [vmem:[#allocation2 + $0xc8] sm:$0xff]
      %v624 = vld [vmem:[#allocation2 + $0xd0] sm:$0xf]
      %v625 = vld [vmem:[#allocation2 + $0xd8] sm:$0xf]
      %v626 = vld [vmem:[%s3] sm:$0xff]
      %v627 = vld [vmem:[%s3 + $0x8] sm:$0xf]
      %629 = vset.pattern.permute.xlu0 0
      %630 = vperm.xlu0 %629, %v626
      %v631 = vpop.permute.xlu0 %630
      %634 = vset.pattern.permute.xlu0 0
      %635 = vperm.xlu0 %634, %v627
      %v636 = vpop.permute.xlu0 %635
      %vm638 = vcmask 883712
      %v640 = vsel %vm638, %v596, 0
      %v643 = vsel %vm638, %v597, 0
      %v646 = vsel %vm379, %v624, 0
      %v649 = vsel %vm379, %v625, 0
      %651 = vmatpush.msra.mxu0 0.0
      %652 = vmatpush.msra.mxu0 0.0
      %653 = vmatpush.msra.mxu0 %v646
      %654 = vmatpush.msra.mxu0 %v622
      %655 = vmatpush.msra.mxu0 %v620
      %656 = vmatpush.msra.mxu0 %v618
      %657 = vmatpush.msra.mxu0 %v616
      %658 = vmatpush.msra.mxu0 %v614
      %659 = vmatpush.msra.mxu0 %v612
      %660 = vmatpush.msra.mxu0 %v610
      %661 = vmatpush.msra.mxu0 %v608
      %662 = vmatpush.msra.mxu0 %v606
      %663 = vmatpush.msra.mxu0 %v604
      %664 = vmatpush.msra.mxu0 %v602
      %665 = vmatpush.msra.mxu0 %v600
      %666 = vmatpush.msra.mxu0 %v598
      %667 = vmatmul.f32.gmra.mxu0 %v640
      %v668 = vpop.f32.mrf.mxu0
      %v669 = vadd.f32 %v631, %v668
      %670 = vmatmul.f32.gmra.mxu0 %v643
      %v671 = vpop.f32.mrf.mxu0
      %v672 = vadd.f32 %v636, %v671
      %673 = vdwg.mxu0
      %674 = vmatpush.msra.mxu0 0.0
      %675 = vmatpush.msra.mxu0 0.0
      %676 = vmatpush.msra.mxu0 %v649
      %677 = vmatpush.msra.mxu0 %v623
      %678 = vmatpush.msra.mxu0 %v621
      %679 = vmatpush.msra.mxu0 %v619
      %680 = vmatpush.msra.mxu0 %v617
      %681 = vmatpush.msra.mxu0 %v615
      %682 = vmatpush.msra.mxu0 %v613
      %683 = vmatpush.msra.mxu0 %v611
      %684 = vmatpush.msra.mxu0 %v609
      %685 = vmatpush.msra.mxu0 %v607
      %686 = vmatpush.msra.mxu0 %v605
      %687 = vmatpush.msra.mxu0 %v603
      %688 = vmatpush.msra.mxu0 %v601
      %689 = vmatpush.msra.mxu0 %v599
      %690 = vmatmul.f32.gmra.mxu0 %v640
      %v691 = vpop.f32.mrf.mxu0
      %v692 = vadd.f32 %v631, %v691
      %693 = vmatmul.f32.gmra.mxu0 %v643
      %v694 = vpop.f32.mrf.mxu0
      %v695 = vadd.f32 %v636, %v694
      %696 = vdwg.mxu0
      %v697 = vld [vmem:[%s4] sm:$0xf]
      %v698 = vld [vmem:[%s5] sm:$0xf]
      %700 = vset.pattern.permute.xlu0 0
      %701 = vperm.xlu0 %700, %v698
      %v702 = vpop.permute.xlu0 %701
      %vm704 = vcmask 97280
      %v706 = vsel %vm704, %v697, 0
      %v709 = vsel %vm379, %v672, 0
      %v712 = vsel %vm379, %v695, 0
      %714 = vmatpush.msra.mxu0 0.0
      %715 = vmatpush.msra.mxu0 0.0
      %716 = vmatpush.msra.mxu0 0.0
      %717 = vmatpush.msra.mxu0 0.0
      %718 = vmatpush.msra.mxu0 0.0
      %719 = vmatpush.msra.mxu0 0.0
      %720 = vmatpush.msra.mxu0 0.0
      %721 = vmatpush.msra.mxu0 0.0
      %722 = vmatpush.msra.mxu0 0.0
      %723 = vmatpush.msra.mxu0 0.0
      %724 = vmatpush.msra.mxu0 0.0
      %725 = vmatpush.msra.mxu0 0.0
      %726 = vmatpush.msra.mxu0 0.0
      %727 = vmatpush.msra.mxu0 0.0
      %728 = vmatpush.msra.mxu0 %v709
      %729 = vmatpush.msra.mxu0 %v669
      %730 = vmatmul.f32.gmra.mxu0 %v706
      %v731 = vpop.f32.mrf.mxu0
      %v732 = vadd.f32 %v702, %v731
      %733 = vdwg.mxu0
      %734 = vmatpush.msra.mxu0 0.0
      %735 = vmatpush.msra.mxu0 0.0
      %736 = vmatpush.msra.mxu0 0.0
      %737 = vmatpush.msra.mxu0 0.0
      %738 = vmatpush.msra.mxu0 0.0
      %739 = vmatpush.msra.mxu0 0.0
      %740 = vmatpush.msra.mxu0 0.0
      %741 = vmatpush.msra.mxu0 0.0
      %742 = vmatpush.msra.mxu0 0.0
      %743 = vmatpush.msra.mxu0 0.0
      %744 = vmatpush.msra.mxu0 0.0
      %745 = vmatpush.msra.mxu0 0.0
      %746 = vmatpush.msra.mxu0 0.0
      %747 = vmatpush.msra.mxu0 0.0
      %748 = vmatpush.msra.mxu0 %v712
      %749 = vmatpush.msra.mxu0 %v692
      %750 = vmatmul.f32.gmra.mxu0 %v706
      %v751 = vpop.f32.mrf.mxu0
      %v752 = vadd.f32 %v702, %v751
      %753 = vdwg.mxu0
      %754 = vrot.lane.b32.xlu0 %v669, 17
      %v755 = vpop.permute.xlu0 %754
      %756 = vrot.lane.b32.xlu0 %v672, 17
      %v757 = vpop.permute.xlu0 %756
      %758 = vrot.lane.b32.xlu0 %v692, 17
      %v759 = vpop.permute.xlu0 %758
      %760 = vrot.lane.b32.xlu0 %v695, 17
      %v761 = vpop.permute.xlu0 %760
      %v762 = vsel %vm335, %v755, %v759
      %v763 = vsel %vm335, %v757, %v761
      %v764 = vsel %vm335, %v759, %v755
      %v765 = vsel %vm335, %v761, %v757
      %v766 = vmul.f32 %v764, %v341
      %v767 = vmul.f32 %v762, %v342
      %v768 = vmul.f32 %v765, %v341
      %v769 = vmul.f32 %v763, %v342
      %770 = vst [vmem:[#allocation2] sm:$0xff] %v766
      %771 = vst [vmem:[#allocation2 + $0x8] sm:$0xff] %v767
      %772 = vst [vmem:[#allocation2 + $0x10] sm:$0xf] %v768
      %773 = vst [vmem:[#allocation2 + $0x18] sm:$0xf] %v769
      %774 = vrot.lane.b32.xlu0 %v669, 16
      %v775 = vpop.permute.xlu0 %774
      %776 = vrot.lane.b32.xlu0 %v672, 16
      %v777 = vpop.permute.xlu0 %776
      %778 = vrot.lane.b32.xlu0 %v692, 16
      %v779 = vpop.permute.xlu0 %778
      %780 = vrot.lane.b32.xlu0 %v695, 16
      %v781 = vpop.permute.xlu0 %780
      %v782 = vsel %vm361, %v775, %v779
      %v783 = vsel %vm361, %v777, %v781
      %v784 = vsel %vm361, %v779, %v775
      %v785 = vsel %vm361, %v781, %v777
      %v786 = vmul.f32 %v784, %v367
      %v787 = vmul.f32 %v782, %v368
      %v788 = vmul.f32 %v785, %v367
      %v789 = vmul.f32 %v783, %v368
      %v794 = vrot.slane %v786, 4
      %v795 = vrot.slane %v787, 4
      %v796 = vrot.slane %v788, 4
      %v797 = vsel %vm379, %v794, %v796
      %v798 = vrot.slane %v789, 4
      %v799 = vsel %vm379, %v795, %v798
      %804 = vst [vmem:[#allocation2 + $0x10] sm:$0xf0] %v794
      %805 = vst [vmem:[#allocation2 + $0x18] sm:$0xf0] %v795
      %806 = vst [vmem:[#allocation2 + $0x20] sm:$0xff] %v797
      %807 = vst [vmem:[#allocation2 + $0x28] sm:$0xff] %v799
      %808 = vrot.lane.b32.xlu0 %v669, 15
      %v809 = vpop.permute.xlu0 %808
      %810 = vrot.lane.b32.xlu0 %v672, 15
      %v811 = vpop.permute.xlu0 %810
      %812 = vrot.lane.b32.xlu0 %v692, 15
      %v813 = vpop.permute.xlu0 %812
      %814 = vrot.lane.b32.xlu0 %v695, 15
      %v815 = vpop.permute.xlu0 %814
      %v816 = vsel %vm402, %v809, %v813
      %v817 = vsel %vm402, %v811, %v815
      %v818 = vsel %vm402, %v813, %v809
      %v819 = vsel %vm402, %v815, %v811
      %v820 = vmul.f32 %v818, %v408
      %v821 = vmul.f32 %v816, %v409
      %v822 = vmul.f32 %v819, %v408
      %v823 = vmul.f32 %v817, %v409
      %824 = vst [vmem:[#allocation2 + $0x30] sm:$0xff] %v820
      %825 = vst [vmem:[#allocation2 + $0x38] sm:$0xff] %v821
      %826 = vst [vmem:[#allocation2 + $0x40] sm:$0xf] %v822
      %827 = vst [vmem:[#allocation2 + $0x48] sm:$0xf] %v823
      %828 = vrot.lane.b32.xlu0 %v669, 1
      %v829 = vpop.permute.xlu0 %828
      %830 = vrot.lane.b32.xlu0 %v672, 1
      %v831 = vpop.permute.xlu0 %830
      %832 = vrot.lane.b32.xlu0 %v692, 1
      %v833 = vpop.permute.xlu0 %832
      %834 = vrot.lane.b32.xlu0 %v695, 1
      %v835 = vpop.permute.xlu0 %834
      %v836 = vsel %vm428, %v829, %v833
      %v837 = vsel %vm428, %v831, %v835
      %v838 = vsel %vm428, %v833, %v829
      %v839 = vsel %vm428, %v835, %v831
      %v840 = vmul.f32 %v838, %v434
      %v841 = vmul.f32 %v836, %v435
      %v842 = vmul.f32 %v839, %v434
      %v843 = vmul.f32 %v837, %v435
      %v848 = vrot.slane %v840, 4
      %v849 = vrot.slane %v841, 4
      %v850 = vrot.slane %v842, 4
      %v851 = vsel %vm379, %v848, %v850
      %v852 = vrot.slane %v843, 4
      %v853 = vsel %vm379, %v849, %v852
      %858 = vst [vmem:[#allocation2 + $0x40] sm:$0xf0] %v848
      %859 = vst [vmem:[#allocation2 + $0x48] sm:$0xf0] %v849
      %860 = vst [vmem:[#allocation2 + $0x50] sm:$0xff] %v851
      %861 = vst [vmem:[#allocation2 + $0x58] sm:$0xff] %v853
      %862 = vst [vmem:[#allocation2 + $0x60] sm:$0xff] %v669
      %863 = vst [vmem:[#allocation2 + $0x68] sm:$0xff] %v692
      %864 = vst [vmem:[#allocation2 + $0x70] sm:$0xf] %v672
      %865 = vst [vmem:[#allocation2 + $0x78] sm:$0xf] %v695
      %866 = vrot.lane.b32.xlu0 %v669, 127
      %v867 = vpop.permute.xlu0 %866
      %868 = vrot.lane.b32.xlu0 %v672, 127
      %v869 = vpop.permute.xlu0 %868
      %870 = vrot.lane.b32.xlu0 %v692, 127
      %v871 = vpop.permute.xlu0 %870
      %872 = vrot.lane.b32.xlu0 %v695, 127
      %v873 = vpop.permute.xlu0 %872
      %v874 = vsel %vm472, %v867, %v871
      %v875 = vsel %vm472, %v869, %v873
      %v876 = vsel %vm472, %v871, %v867
      %v877 = vsel %vm472, %v873, %v869
      %v878 = vmul.f32 %v874, %v478
      %v879 = vmul.f32 %v876, %v479
      %v880 = vmul.f32 %v875, %v478
      %v881 = vmul.f32 %v877, %v479
      %v886 = vrot.slane %v878, 4
      %v887 = vrot.slane %v879, 4
      %v888 = vrot.slane %v880, 4
      %v889 = vsel %vm379, %v886, %v888
      %v890 = vrot.slane %v881, 4
      %v891 = vsel %vm379, %v887, %v890
      %896 = vst [vmem:[#allocation2 + $0x70] sm:$0xf0] %v886
      %897 = vst [vmem:[#allocation2 + $0x78] sm:$0xf0] %v887
      %898 = vst [vmem:[#allocation2 + $0x80] sm:$0xff] %v889
      %899 = vst [vmem:[#allocation2 + $0x88] sm:$0xff] %v891
      %900 = vrot.lane.b32.xlu0 %v669, 113
      %v901 = vpop.permute.xlu0 %900
      %902 = vrot.lane.b32.xlu0 %v672, 113
      %v903 = vpop.permute.xlu0 %902
      %904 = vrot.lane.b32.xlu0 %v692, 113
      %v905 = vpop.permute.xlu0 %904
      %906 = vrot.lane.b32.xlu0 %v695, 113
      %v907 = vpop.permute.xlu0 %906
      %v908 = vsel %vm512, %v901, %v905
      %v909 = vsel %vm512, %v903, %v907
      %v910 = vsel %vm512, %v905, %v901
      %v911 = vsel %vm512, %v907, %v903
      %v912 = vmul.f32 %v908, %v518
      %v913 = vmul.f32 %v910, %v519
      %v914 = vmul.f32 %v909, %v518
      %v915 = vmul.f32 %v911, %v519
      %916 = vst [vmem:[#allocation2 + $0x90] sm:$0xff] %v912
      %917 = vst [vmem:[#allocation2 + $0x98] sm:$0xff] %v913
      %918 = vst [vmem:[#allocation2 + $0xa0] sm:$0xf] %v914
      %919 = vst [vmem:[#allocation2 + $0xa8] sm:$0xf] %v915
      %920 = vrot.lane.b32.xlu0 %v669, 112
      %v921 = vpop.permute.xlu0 %920
      %922 = vrot.lane.b32.xlu0 %v672, 112
      %v923 = vpop.permute.xlu0 %922
      %924 = vrot.lane.b32.xlu0 %v692, 112
      %v925 = vpop.permute.xlu0 %924
      %926 = vrot.lane.b32.xlu0 %v695, 112
      %v927 = vpop.permute.xlu0 %926
      %v928 = vsel %vm538, %v921, %v925
      %v929 = vsel %vm538, %v923, %v927
      %v930 = vsel %vm538, %v925, %v921
      %v931 = vsel %vm538, %v927, %v923
      %v932 = vmul.f32 %v928, %v544
      %v933 = vmul.f32 %v930, %v545
      %v934 = vmul.f32 %v929, %v544
      %v935 = vmul.f32 %v931, %v545
      %v940 = vrot.slane %v932, 4
      %v941 = vrot.slane %v933, 4
      %v942 = vrot.slane %v934, 4
      %v943 = vsel %vm379, %v940, %v942
      %v944 = vrot.slane %v935, 4
      %v945 = vsel %vm379, %v941, %v944
      %950 = vst [vmem:[#allocation2 + $0xa0] sm:$0xf0] %v940
      %951 = vst [vmem:[#allocation2 + $0xa8] sm:$0xf0] %v941
      %952 = vst [vmem:[#allocation2 + $0xb0] sm:$0xff] %v943
      %953 = vst [vmem:[#allocation2 + $0xb8] sm:$0xff] %v945
      %954 = vrot.lane.b32.xlu0 %v669, 111
      %v955 = vpop.permute.xlu0 %954
      %956 = vrot.lane.b32.xlu0 %v672, 111
      %v957 = vpop.permute.xlu0 %956
      %958 = vrot.lane.b32.xlu0 %v692, 111
      %v959 = vpop.permute.xlu0 %958
      %960 = vrot.lane.b32.xlu0 %v695, 111
      %v961 = vpop.permute.xlu0 %960
      %v962 = vsel %vm578, %v955, %v959
      %v963 = vsel %vm578, %v957, %v961
      %v964 = vsel %vm578, %v959, %v955
      %v965 = vsel %vm578, %v961, %v957
      %v966 = vmul.f32 %v962, %v584
      %v967 = vmul.f32 %v964, %v585
      %v968 = vmul.f32 %v963, %v584
      %v969 = vmul.f32 %v965, %v585
      %970 = vst [vmem:[#allocation2 + $0xc0] sm:$0xff] %v966
      %971 = vst [vmem:[#allocation2 + $0xc8] sm:$0xff] %v967
      %972 = vst [vmem:[#allocation2 + $0xd0] sm:$0xf] %v968
      %973 = vst [vmem:[#allocation2 + $0xd8] sm:$0xf] %v969
      %974 = vrot.lane.b32.xlu0 %v732, 17
      %v975 = vpop.permute.xlu0 %974
      %976 = vrot.lane.b32.xlu0 %v752, 17
      %v977 = vpop.permute.xlu0 %976
      %v978 = vsel %vm335, %v975, %v977
      %v979 = vsel %vm335, %v977, %v975
      %v980 = vmul.f32 %v979, %v341
      %v981 = vmul.f32 %v978, %v342
      %v984 = vrot.slane %v980, 4
      %v985 = vrot.slane %v981, 4
      %988 = vst [vmem:[#allocation2 + $0xd0] sm:$0xf0] %v984
      %989 = vst [vmem:[#allocation2 + $0xd8] sm:$0xf0] %v985
      %990 = vrot.lane.b32.xlu0 %v732, 16
      %v991 = vpop.permute.xlu0 %990
      %992 = vrot.lane.b32.xlu0 %v752, 16
      %v993 = vpop.permute.xlu0 %992
      %v994 = vsel %vm361, %v991, %v993
      %v995 = vsel %vm361, %v993, %v991
      %v996 = vmul.f32 %v995, %v367
      %v997 = vmul.f32 %v994, %v368
      %998 = vst [vmem:[#allocation2 + $0xe0] sm:$0xf] %v996
      %999 = vst [vmem:[#allocation2 + $0xe8] sm:$0xf] %v997
      %1000 = vrot.lane.b32.xlu0 %v732, 15
      %v1001 = vpop.permute.xlu0 %1000
      %1002 = vrot.lane.b32.xlu0 %v752, 15
      %v1003 = vpop.permute.xlu0 %1002
      %v1004 = vsel %vm402, %v1001, %v1003
      %v1005 = vsel %vm402, %v1003, %v1001
      %v1006 = vmul.f32 %v1005, %v408
      %v1007 = vmul.f32 %v1004, %v409
      %v1010 = vrot.slane %v1006, 4
      %v1011 = vrot.slane %v1007, 4
      %1014 = vst [vmem:[#allocation2 + $0xe0] sm:$0xf0] %v1010
      %1015 = vst [vmem:[#allocation2 + $0xe8] sm:$0xf0] %v1011
      %1016 = vrot.lane.b32.xlu0 %v732, 1
      %v1017 = vpop.permute.xlu0 %1016
      %1018 = vrot.lane.b32.xlu0 %v752, 1
      %v1019 = vpop.permute.xlu0 %1018
      %v1020 = vsel %vm428, %v1017, %v1019
      %v1021 = vsel %vm428, %v1019, %v1017
      %v1022 = vmul.f32 %v1021, %v434
      %v1023 = vmul.f32 %v1020, %v435
      %1024 = vst [vmem:[#allocation2 + $0xf0] sm:$0xf] %v1022
      %1025 = vst [vmem:[#allocation2 + $0xf8] sm:$0xf] %v1023
      %v1028 = vrot.slane %v732, 4
      %v1029 = vrot.slane %v752, 4
      %1032 = vst [vmem:[#allocation2 + $0xf0] sm:$0xf0] %v1028
      %1033 = vst [vmem:[#allocation2 + $0xf8] sm:$0xf0] %v1029
      %1034 = vrot.lane.b32.xlu0 %v732, 127
      %v1035 = vpop.permute.xlu0 %1034
      %1036 = vrot.lane.b32.xlu0 %v752, 127
      %v1037 = vpop.permute.xlu0 %1036
      %v1038 = vsel %vm472, %v1035, %v1037
      %v1039 = vsel %vm472, %v1037, %v1035
      %v1040 = vmul.f32 %v1038, %v478
      %v1041 = vmul.f32 %v1039, %v479
      %1042 = vst [vmem:[#allocation2 + $0x100] sm:$0xf] %v1040
      %1043 = vst [vmem:[#allocation2 + $0x108] sm:$0xf] %v1041
      %1044 = vrot.lane.b32.xlu0 %v732, 113
      %v1045 = vpop.permute.xlu0 %1044
      %1046 = vrot.lane.b32.xlu0 %v752, 113
      %v1047 = vpop.permute.xlu0 %1046
      %v1048 = vsel %vm512, %v1045, %v1047
      %v1049 = vsel %vm512, %v1047, %v1045
      %v1050 = vmul.f32 %v1048, %v518
      %v1051 = vmul.f32 %v1049, %v519
      %v1054 = vrot.slane %v1050, 4
      %v1055 = vrot.slane %v1051, 4
      %1058 = vst [vmem:[#allocation2 + $0x100] sm:$0xf0] %v1054
      %1059 = vst [vmem:[#allocation2 + $0x108] sm:$0xf0] %v1055
      %1060 = vrot.lane.b32.xlu0 %v732, 112
      %v1061 = vpop.permute.xlu0 %1060
      %1062 = vrot.lane.b32.xlu0 %v752, 112
      %v1063 = vpop.permute.xlu0 %1062
      %v1064 = vsel %vm538, %v1061, %v1063
      %v1065 = vsel %vm538, %v1063, %v1061
      %v1066 = vmul.f32 %v1064, %v544
      %v1067 = vmul.f32 %v1065, %v545
      %1068 = vst [vmem:[#allocation2 + $0x110] sm:$0xf] %v1066
      %1069 = vst [vmem:[#allocation2 + $0x118] sm:$0xf] %v1067
      %1070 = vrot.lane.b32.xlu0 %v732, 111
      %v1071 = vpop.permute.xlu0 %1070
      %1072 = vrot.lane.b32.xlu0 %v752, 111
      %v1073 = vpop.permute.xlu0 %1072
      %v1074 = vsel %vm578, %v1071, %v1073
      %v1075 = vsel %vm578, %v1073, %v1071
      %v1076 = vmul.f32 %v1074, %v584
      %v1077 = vmul.f32 %v1075, %v585
      %v1080 = vrot.slane %v1076, 4
      %v1081 = vrot.slane %v1077, 4
      %1084 = vst [vmem:[#allocation2 + $0x110] sm:$0xf0] %v1080
      %1085 = vst [vmem:[#allocation2 + $0x118] sm:$0xf0] %v1081
      %v1086 = vld [vmem:[%s6] sm:$0xff]
      %v1087 = vld [vmem:[%s6 + $0x8] sm:$0xff]
      %v1088 = vld [vmem:[%s6 + $0x10] sm:$0xf]
      %v1089 = vld [vmem:[%s6 + $0x18] sm:$0xf]
      %v1090 = vld [vmem:[#allocation2] sm:$0xff]
      %v1091 = vld [vmem:[#allocation2 + $0x8] sm:$0xff]
      %v1092 = vld [vmem:[#allocation2 + $0x10] sm:$0xff]
      %v1093 = vld [vmem:[#allocation2 + $0x18] sm:$0xff]
      %v1094 = vld [vmem:[#allocation2 + $0x20] sm:$0xff]
      %v1095 = vld [vmem:[#allocation2 + $0x28] sm:$0xff]
      %v1096 = vld [vmem:[#allocation2 + $0x30] sm:$0xff]
      %v1097 = vld [vmem:[#allocation2 + $0x38] sm:$0xff]
      %v1098 = vld [vmem:[#allocation2 + $0x40] sm:$0xff]
      %v1099 = vld [vmem:[#allocation2 + $0x48] sm:$0xff]
      %v1100 = vld [vmem:[#allocation2 + $0x50] sm:$0xff]
      %v1101 = vld [vmem:[#allocation2 + $0x58] sm:$0xff]
      %v1102 = vld [vmem:[#allocation2 + $0x60] sm:$0xff]
      %v1103 = vld [vmem:[#allocation2 + $0x68] sm:$0xff]
      %v1104 = vld [vmem:[#allocation2 + $0x70] sm:$0xff]
      %v1105 = vld [vmem:[#allocation2 + $0x78] sm:$0xff]
      %v1106 = vld [vmem:[#allocation2 + $0x80] sm:$0xff]
      %v1107 = vld [vmem:[#allocation2 + $0x88] sm:$0xff]
      %v1108 = vld [vmem:[#allocation2 + $0x90] sm:$0xff]
      %v1109 = vld [vmem:[#allocation2 + $0x98] sm:$0xff]
      %v1110 = vld [vmem:[#allocation2 + $0xa0] sm:$0xff]
      %v1111 = vld [vmem:[#allocation2 + $0xa8] sm:$0xff]
      %v1112 = vld [vmem:[#allocation2 + $0xb0] sm:$0xff]
      %v1113 = vld [vmem:[#allocation2 + $0xb8] sm:$0xff]
      %v1114 = vld [vmem:[#allocation2 + $0xc0] sm:$0xff]
      %v1115 = vld [vmem:[#allocation2 + $0xc8] sm:$0xff]
      %v1116 = vld [vmem:[#allocation2 + $0xd0] sm:$0xff]
      %v1117 = vld [vmem:[#allocation2 + $0xd8] sm:$0xff]
      %v1118 = vld [vmem:[#allocation2 + $0xe0] sm:$0xff]
      %v1119 = vld [vmem:[#allocation2 + $0xe8] sm:$0xff]
      %v1120 = vld [vmem:[#allocation2 + $0xf0] sm:$0xff]
      %v1121 = vld [vmem:[#allocation2 + $0xf8] sm:$0xff]
      %v1122 = vld [vmem:[#allocation2 + $0x100] sm:$0xff]
      %v1123 = vld [vmem:[#allocation2 + $0x108] sm:$0xff]
      %v1124 = vld [vmem:[#allocation2 + $0x110] sm:$0xff]
      %v1125 = vld [vmem:[#allocation2 + $0x118] sm:$0xff]
      %v1126 = vld [vmem:[%s7] sm:$0xff]
      %v1127 = vld [vmem:[%s7 + $0x8] sm:$0xf]
      %1129 = vset.pattern.permute.xlu0 0
      %1130 = vperm.xlu0 %1129, %v1126
      %v1131 = vpop.permute.xlu0 %1130
      %1134 = vset.pattern.permute.xlu0 0
      %1135 = vperm.xlu0 %1134, %v1127
      %v1136 = vpop.permute.xlu0 %1135
      %vm1138 = vcmask 130048
      %v1140 = vsel %vm1138, %v1087, 0
      %v1143 = vsel %vm1138, %v1089, 0
      %1145 = vmatpush.msra.mxu0 %v1120
      %1146 = vmatpush.msra.mxu0 %v1118
      %1147 = vmatpush.msra.mxu0 %v1116
      %1148 = vmatpush.msra.mxu0 %v1114
      %1149 = vmatpush.msra.mxu0 %v1112
      %1150 = vmatpush.msra.mxu0 %v1110
      %1151 = vmatpush.msra.mxu0 %v1108
      %1152 = vmatpush.msra.mxu0 %v1106
      %1153 = vmatpush.msra.mxu0 %v1104
      %1154 = vmatpush.msra.mxu0 %v1102
      %1155 = vmatpush.msra.mxu0 %v1100
      %1156 = vmatpush.msra.mxu0 %v1098
      %1157 = vmatpush.msra.mxu0 %v1096
      %1158 = vmatpush.msra.mxu0 %v1094
      %1159 = vmatpush.msra.mxu0 %v1092
      %1160 = vmatpush.msra.mxu0 %v1090
      %1161 = vmatmul.f32.gmra.mxu0 %v1086
      %v1162 = vpop.f32.mrf.mxu0
      %v1163 = vadd.f32 %v1131, %v1162
      %1164 = vmatmul.f32.gmra.mxu0 %v1088
      %v1165 = vpop.f32.mrf.mxu0
      %v1166 = vadd.f32 %v1136, %v1165
      %1167 = vdwg.mxu0
      %1168 = vmatpush.msra.mxu0 0.0
      %1169 = vmatpush.msra.mxu0 0.0
      %1170 = vmatpush.msra.mxu0 0.0
      %1171 = vmatpush.msra.mxu0 0.0
      %1172 = vmatpush.msra.mxu0 0.0
      %1173 = vmatpush.msra.mxu0 0.0
      %1174 = vmatpush.msra.mxu0 0.0
      %1175 = vmatpush.msra.mxu0 0.0
      %1176 = vmatpush.msra.mxu0 0.0
      %1177 = vmatpush.msra.mxu0 0.0
      %1178 = vmatpush.msra.mxu0 0.0
      %1179 = vmatpush.msra.mxu0 0.0
      %1180 = vmatpush.msra.mxu0 0.0
      %1181 = vmatpush.msra.mxu0 0.0
      %1182 = vmatpush.msra.mxu0 %v1124
      %1183 = vmatpush.msra.mxu0 %v1122
      %1184 = vmatmul.f32.gmra.mxu0 %v1140
      %v1185 = vpop.f32.mrf.mxu0
      %v1186 = vadd.f32 %v1163, %v1185
      %1187 = vmatmul.f32.gmra.mxu0 %v1143
      %v1188 = vpop.f32.mrf.mxu0
      %v1189 = vadd.f32 %v1166, %v1188
      %1190 = vdwg.mxu0
      %1191 = vmatpush.msra.mxu0 %v1121
      %1192 = vmatpush.msra.mxu0 %v1119
      %1193 = vmatpush.msra.mxu0 %v1117
      %1194 = vmatpush.msra.mxu0 %v1115
      %1195 = vmatpush.msra.mxu0 %v1113
      %1196 = vmatpush.msra.mxu0 %v1111
      %1197 = vmatpush.msra.mxu0 %v1109
      %1198 = vmatpush.msra.mxu0 %v1107
      %1199 = vmatpush.msra.mxu0 %v1105
      %1200 = vmatpush.msra.mxu0 %v1103
      %1201 = vmatpush.msra.mxu0 %v1101
      %1202 = vmatpush.msra.mxu0 %v1099
      %1203 = vmatpush.msra.mxu0 %v1097
      %1204 = vmatpush.msra.mxu0 %v1095
      %1205 = vmatpush.msra.mxu0 %v1093
      %1206 = vmatpush.msra.mxu0 %v1091
      %1207 = vmatmul.f32.gmra.mxu0 %v1086
      %v1208 = vpop.f32.mrf.mxu0
      %v1209 = vadd.f32 %v1131, %v1208
      %1210 = vmatmul.f32.gmra.mxu0 %v1088
      %v1211 = vpop.f32.mrf.mxu0
      %v1212 = vadd.f32 %v1136, %v1211
      %1213 = vdwg.mxu0
      %1214 = vmatpush.msra.mxu0 0.0
      %1215 = vmatpush.msra.mxu0 0.0
      %1216 = vmatpush.msra.mxu0 0.0
      %1217 = vmatpush.msra.mxu0 0.0
      %1218 = vmatpush.msra.mxu0 0.0
      %1219 = vmatpush.msra.mxu0 0.0
      %1220 = vmatpush.msra.mxu0 0.0
      %1221 = vmatpush.msra.mxu0 0.0
      %1222 = vmatpush.msra.mxu0 0.0
      %1223 = vmatpush.msra.mxu0 0.0
      %1224 = vmatpush.msra.mxu0 0.0
      %1225 = vmatpush.msra.mxu0 0.0
      %1226 = vmatpush.msra.mxu0 0.0
      %1227 = vmatpush.msra.mxu0 0.0
      %1228 = vmatpush.msra.mxu0 %v1125
      %1229 = vmatpush.msra.mxu0 %v1123
      %1230 = vmatmul.f32.gmra.mxu0 %v1140
      %v1231 = vpop.f32.mrf.mxu0
      %v1232 = vadd.f32 %v1209, %v1231
      %1233 = vmatmul.f32.gmra.mxu0 %v1143
      %v1234 = vpop.f32.mrf.mxu0
      %v1235 = vadd.f32 %v1212, %v1234
      %1236 = vdwg.mxu0
      %v1237 = vadd.f32 %v321, %v1186
      %v1238 = vadd.f32 %v322, %v1232
      %v1239 = vadd.f32 %v323, %v1189
      %v1240 = vadd.f32 %v324, %v1235
      %1241 = vst [vmem:[%s305] sm:$0xff] %v1237
      %1242 = vst [vmem:[%s305 + $0x8] sm:$0xff] %v1238
      %1243 = vst [vmem:[%s305 + $0x10] sm:$0xf] %v1239
      %1244 = vst [vmem:[%s305 + $0x18] sm:$0xf] %v1240
      %p1245 = scmp.lt.s32.totalorder %s19, 1
      %s1246 = scalar_select %p1245, %s19, 1
      %s1247 = smul.addr %s1246, 4
      %s1248 = smul.addr %s1247, 8
      %s1249 = scalar_lea.vmem %s8, %s1248
      // Predicated region
      $region53: #{pfrb_forward.1} parent=51 // pred_check
        %p1250 = pneg %p210
      $region54: #{pfrb_forward.1} parent=51 // pred_check_branch
        %1252 = sbr.rel (%p1250) target = $region56
      $region55: #{pfrb_forward.1} parent=51 // pred_region
        _
      $region56: #{pfrb_forward.1} parent=51 // pred_fallthru
        _
    $region52: #{pfrb_forward.1} parent=5 // pred_fallthru
      _
    %p1253 = scmp.le.s32.totalorder 2, %s14
    // Predicated region
    $region57: #{pfrb_forward.1} parent=5 // pred_check
      %p1254 = pneg %p1253
    $region58: #{pfrb_forward.1} parent=5 // pred_check_branch
      %1256 = sbr.rel (%p1254) target = $region60
    $region59: #{pfrb_forward.1} parent=5 // pred_region
      %s1257 = ssub.s32 %s14, 2
      // Predicated region
      $region61: #{pfrb_forward.1} parent=59 // pred_check
        %p1258 = pneg %p216
      $region62: #{pfrb_forward.1} parent=59 // pred_check_branch
        %1260 = sbr.rel (%p1258) target = $region64
      $region63: #{pfrb_forward.1} parent=59 // pred_region
        %p1261 = scmp.lt.s32.totalorder %s20, 1
        %s1262 = scalar_select %p1261, %s20, 1
        %s1263 = smul.addr %s1262, 4
        %s1264 = smul.addr %s1263, 8
        %s1265 = scalar_lea.vmem %s8, %s1264
      $region64: #{pfrb_forward.1} parent=59 // pred_fallthru
        _
    $region60: #{pfrb_forward.1} parent=5 // pred_fallthru
      _
  $region6: #{pfrb_forward.1} parent=0 // loop_footer
    %s18 = sadd.s32 1, %s14
  $region7: #{pfrb_forward.1} parent=0 // loop_footer_branch
    %13 = sbr.rel target = $region3
  $region8: #{pfrb_forward.1} parent=0 // loop_exit
    _

</llo_original>
